<compile_context>
chip_gen: v7x
topology: tpu7x:2x2x1
jax: 0.10.0
libtpu: 0.0.40
codegen_flags: <defaults>
</compile_context>

<pallas_src>
import functools

import jax
import jax.numpy as jnp
from jax import lax
from jax.experimental import pallas as pl
from jax.experimental.pallas import tpu as pltpu

EPS = 1e-5


# --------------------------------------------------------------------------- #
# Fused kernel: conv1 + skip -> global BN stats -> BN + ReLU -> conv2.         #
# --------------------------------------------------------------------------- #
def _fused_kernel(x0_ref, skip_ref, m1_ref, b1_ref, gamma_ref, beta_ref,
                  m2_ref, b2_ref, out_ref, xpad_scr, ypad_scr,
                  *, n, h, w, cin, cout):
    f32 = jnp.float32
    wcin = w * cin
    wcout = w * cout

    # ---- conv1 input: zero only the two H-halo rows (W borders are baked into M1).
    xpad_scr[:, 0:1, :] = jnp.zeros((n, 1, wcin), f32)
    xpad_scr[:, h + 1:h + 2, :] = jnp.zeros((n, 1, wcin), f32)
    xpad_scr[:, 1:h + 1, :] = x0_ref[...]

    # ---- conv1 + bias + skip fusion (the BatchNorm input), kept resident. --------
    pre = []                                        # list of (H, W*Cout) f32 slabs
    for nn in range(n):                             # N=2: tiny static unroll
        xp = xpad_scr[nn]                           # (H+2, W*Cin)
        acc = jnp.dot(xp[0:h, :], m1_ref[0], preferred_element_type=f32)
        acc = acc + jnp.dot(xp[1:h + 1, :], m1_ref[1], preferred_element_type=f32)
        acc = acc + jnp.dot(xp[2:h + 2, :], m1_ref[2], preferred_element_type=f32)
        pre.append(acc + b1_ref[...] + skip_ref[nn])

    # ---- exact global (training-mode, biased) BatchNorm statistics, lane-dense. --
    # group[L', L] = 1 iff lanes L' and L hold the same channel (L % cout).
    l_src = lax.broadcasted_iota(jnp.int32, (wcout, wcout), 0)
    l_dst = lax.broadcasted_iota(jnp.int32, (wcout, wcout), 1)
    group = ((l_src % cout) == (l_dst % cout)).astype(f32)

    sum_l = jnp.zeros((1, wcout), f32)
    ssq_l = jnp.zeros((1, wcout), f32)
    for nn in range(n):
        sum_l = sum_l + jnp.sum(
            jnp.dot(pre[nn], group, preferred_element_type=f32),
            axis=0, keepdims=True)
        ssq_l = ssq_l + jnp.sum(
            jnp.dot(pre[nn] * pre[nn], group, preferred_element_type=f32),
            axis=0, keepdims=True)

    inv_count = 1.0 / float(n * h * w)
    mean_l = sum_l * inv_count
    var_l = jnp.maximum(ssq_l * inv_count - mean_l * mean_l, 0.0)   # clamp >= 0
    scale_l = gamma_ref[...] * lax.rsqrt(var_l + EPS)               # (1, W*Cout)
    shift_l = beta_ref[...] - mean_l * scale_l

    # ---- BN + ReLU into the H-padded conv2 input scratch (borders zeroed once). --
    ypad_scr[:, 0:1, :] = jnp.zeros((n, 1, wcout), f32)
    ypad_scr[:, h + 1:h + 2, :] = jnp.zeros((n, 1, wcout), f32)
    for nn in range(n):
        y = jnp.maximum(pre[nn] * scale_l + shift_l, 0.0)           # (H, W*Cout)
        ypad_scr[nn:nn + 1, 1:h + 1, :] = y.reshape(1, h, wcout)

    # ---- conv2 + bias, full 128-lane stores. --------------------------------------
    for nn in range(n):
        yp = ypad_scr[nn]                           # (H+2, W*Cout)
        acc = jnp.dot(yp[0:h, :], m2_ref[0], preferred_element_type=f32)
        acc = acc + jnp.dot(yp[1:h + 1, :], m2_ref[1], preferred_element_type=f32)
        acc = acc + jnp.dot(yp[2:h + 2, :], m2_ref[2], preferred_element_type=f32)
        out_ref[nn:nn + 1, :, :] = (acc + b2_ref[...]).reshape(
            1, h, wcout).astype(out_ref.dtype)


# --------------------------------------------------------------------------- #
# Wrapper: lane-dense relayout + weight folding + one pallas_call.             #
# --------------------------------------------------------------------------- #
def _build_w_shift_matrix(wgt_hwio, width):
    """Fold a 3x3 SAME conv's W-offset and channel mixing into (kh, W*Cin, W*Cout).

    m[dh, w_src*Cin + ci, w_out*Cout + co] = wgt[dh, w_src - w_out + 1, ci, co]
    (zero when |w_src - w_out| > 1), so on lane-dense (H, W*C) slabs:
        out[h] = sum_dh  x_hpad[h + dh] @ m[dh]
    """
    kh, kw, cin, cout = wgt_hwio.shape
    ws = jnp.arange(width)[:, None]
    wo = jnp.arange(width)[None, :]
    dwi = ws - wo + (kw // 2)
    valid = (dwi >= 0) & (dwi < kw)
    m = wgt_hwio[:, jnp.clip(dwi, 0, kw - 1), :, :]                 # (kh, W, W, Cin, Cout)
    m = m * valid[None, :, :, None, None].astype(wgt_hwio.dtype)
    m = jnp.transpose(m, (0, 1, 3, 2, 4))                           # (kh, Wsrc, Cin, Wout, Cout)
    return m.reshape(kh, width * cin, width * cout)


@jax.jit
def concatenation_forward(x0_nchw, x1_nchw, params):
    """x0: (N, Cin, H, W), x1: (N, Cout, H, W)  ->  (N, Cout, H, W)."""
    w1, b1, gamma, beta, w2, b2 = params
    n, cin, h, w = x0_nchw.shape
    cout = w1.shape[-1]
    f32 = jnp.float32
    wcin, wcout = w * cin, w * cout

    # NCHW -> lane-dense (N, H, W*C) slabs (one transpose + free reshape per input).
    x0 = jnp.transpose(x0_nchw, (0, 2, 3, 1)).astype(f32).reshape(n, h, wcin)
    skip = jnp.transpose(x1_nchw, (0, 2, 3, 1)).astype(f32).reshape(n, h, wcout)

    # Weight / bias / affine preprocessing (tiny, weight-only; hoistable in practice).
    m1 = _build_w_shift_matrix(w1.astype(f32), w)                   # (3, W*Cin,  W*Cout)
    m2 = _build_w_shift_matrix(w2.astype(f32), w)                   # (3, W*Cout, W*Cout)

    def tile_lane(v):                                               # per-channel -> lane pattern
        return jnp.tile(v.astype(f32).reshape(1, cout), (1, w))     # (1, W*Cout)

    b1_l, b2_l = tile_lane(b1), tile_lane(b2)
    g_l, bt_l = tile_lane(gamma), tile_lane(beta)

    kern = functools.partial(_fused_kernel, n=n, h=h, w=w, cin=cin, cout=cout)
    out = pl.pallas_call(
        kern,
        grid=(1,),
        in_specs=[
            pl.BlockSpec((n, h, wcin), lambda i: (0, 0, 0)),        # x0 slab
            pl.BlockSpec((n, h, wcout), lambda i: (0, 0, 0)),       # skip slab
            pl.BlockSpec((3, wcin, wcout), lambda i: (0, 0, 0)),    # conv1 shift matrices
            pl.BlockSpec((1, wcout), lambda i: (0, 0)),             # bias1 (lane-tiled)
            pl.BlockSpec((1, wcout), lambda i: (0, 0)),             # gamma (lane-tiled)
            pl.BlockSpec((1, wcout), lambda i: (0, 0)),             # beta  (lane-tiled)
            pl.BlockSpec((3, wcout, wcout), lambda i: (0, 0, 0)),   # conv2 shift matrices
            pl.BlockSpec((1, wcout), lambda i: (0, 0)),             # bias2 (lane-tiled)
        ],
        out_specs=pl.BlockSpec((n, h, wcout), lambda i: (0, 0, 0)),
        out_shape=jax.ShapeDtypeStruct((n, h, wcout), f32),
        scratch_shapes=[
            pltpu.VMEM((n, h + 2, wcin), f32),                      # H-padded conv1 input
            pltpu.VMEM((n, h + 2, wcout), f32),                     # H-padded conv2 input
        ],
        compiler_params=pltpu.CompilerParams(
            dimension_semantics=("arbitrary",),
            vmem_limit_bytes=32 * 1024 * 1024),
    )(x0, skip, m1, b1_l, g_l, bt_l, m2, b2_l)

    # Lane-dense (N, H, W*Cout) -> NCHW (cheap reshape + one transpose).
    return jnp.transpose(out.reshape(n, h, w, cout), (0, 3, 1, 2))


def reference_forward(x0, x1, params):
    """Pure-JAX reference (NCHW), mirrors the interpreted PyTorch semantics."""
    w1, b1, gamma, beta, w2, b2 = params
    dn = ('NCHW', 'HWIO', 'NCHW')
    out1 = lax.conv_general_dilated(x0, w1, (1, 1), 'SAME',
                                    dimension_numbers=dn) + b1[None, :, None, None]
    pre = out1 + x1
    mean = pre.mean(axis=(0, 2, 3), keepdims=True)
    var = ((pre - mean) ** 2).mean(axis=(0, 2, 3), keepdims=True)
    out2 = jnp.maximum((pre - mean) * lax.rsqrt(var + EPS)
                       * gamma[None, :, None, None] + beta[None, :, None, None], 0.0)
    out3 = lax.conv_general_dilated(out2, w2, (1, 1), 'SAME',
                                    dimension_numbers=dn) + b2[None, :, None, None]
    return out3


if __name__ == "__main__":
    key = jax.random.PRNGKey(0)
    k = jax.random.split(key, 8)

    N, Cin, Cout, H, W = 2, 4, 8, 16, 16

    # Deterministic synthetic parameters (shapes from Conv2d/BatchNorm2d in __init__).
    w1 = 0.1 * jax.random.normal(k[0], (3, 3, Cin, Cout), jnp.float32)   # HWIO
    b1 = 0.05 * jax.random.normal(k[1], (Cout,), jnp.float32)
    gamma = 1.0 + 0.1 * jax.random.normal(k[2], (Cout,), jnp.float32)
    beta = 0.05 * jax.random.normal(k[3], (Cout,), jnp.float32)
    w2 = 0.1 * jax.random.normal(k[4], (3, 3, Cout, Cout), jnp.float32)  # HWIO
    b2 = 0.05 * jax.random.normal(k[5], (Cout,), jnp.float32)
    params = (w1, b1, gamma, beta, w2, b2)

    # Inputs: x = (upsampled features, skip features)  (PyTorch NCHW)
    x0 = jax.random.normal(k[6], (N, Cin, H, W), jnp.float32)
    x1 = jax.random.normal(k[7], (N, Cout, H, W), jnp.float32)

    ref = jax.block_until_ready(reference_forward(x0, x1, params))
    out = jax.block_until_ready(concatenation_forward(x0, x1, params))

    assert out.shape == (N, Cout, H, W), out.shape
    err = float(jnp.max(jnp.abs(out - ref)))
    assert err < 1e-3, err

    print("KERNEL_OK")
</pallas_src>

<mosaic_0001>
module attributes {stable_mosaic.version = 11 : i64} {
  func.func @_fused_kernel(%arg0: i32, %arg1: memref<2x16x64xf32, #tpu.memory_space<vmem>>, %arg2: memref<2x16x128xf32, #tpu.memory_space<vmem>>, %arg3: memref<3x64x128xf32, #tpu.memory_space<vmem>>, %arg4: memref<1x128xf32, #tpu.memory_space<vmem>>, %arg5: memref<1x128xf32, #tpu.memory_space<vmem>>, %arg6: memref<1x128xf32, #tpu.memory_space<vmem>>, %arg7: memref<3x128x128xf32, #tpu.memory_space<vmem>>, %arg8: memref<1x128xf32, #tpu.memory_space<vmem>>, %arg9: memref<2x16x128xf32, #tpu.memory_space<vmem>>, %arg10: memref<2x18x64xf32, #tpu.memory_space<vmem>>, %arg11: memref<2x18x128xf32, #tpu.memory_space<vmem>>) attributes {dimension_semantics = [#tpu.dimension_semantics<arbitrary>], iteration_bounds = array<i64: 1>, scalar_prefetch = 0 : i64, scratch_operands = 2 : i64, tpu.core_type = #tpu.core_type<tc>, window_params = [{pipeline_mode = #tpu.pipeline_mode<synchronous>, transform_indices = @transform_0, window_bounds = array<i64: 2, 16, 64>}, {pipeline_mode = #tpu.pipeline_mode<synchronous>, transform_indices = @transform_1, window_bounds = array<i64: 2, 16, 128>}, {pipeline_mode = #tpu.pipeline_mode<synchronous>, transform_indices = @transform_2, window_bounds = array<i64: 3, 64, 128>}, {pipeline_mode = #tpu.pipeline_mode<synchronous>, transform_indices = @transform_3, window_bounds = array<i64: 1, 128>}, {pipeline_mode = #tpu.pipeline_mode<synchronous>, transform_indices = @transform_4, window_bounds = array<i64: 1, 128>}, {pipeline_mode = #tpu.pipeline_mode<synchronous>, transform_indices = @transform_5, window_bounds = array<i64: 1, 128>}, {pipeline_mode = #tpu.pipeline_mode<synchronous>, transform_indices = @transform_6, window_bounds = array<i64: 3, 128, 128>}, {pipeline_mode = #tpu.pipeline_mode<synchronous>, transform_indices = @transform_7, window_bounds = array<i64: 1, 128>}, {pipeline_mode = #tpu.pipeline_mode<synchronous>, transform_indices = @transform_8, window_bounds = array<i64: 2, 16, 128>}]} {
    %cst = arith.constant 0.000000e+00 : f32
    %0 = vector.broadcast %cst : f32 to vector<2x1x64xf32>
    %c0 = arith.constant 0 : index
    %c0_0 = arith.constant 0 : index
    %c0_1 = arith.constant 0 : index
    %1 = vector.load %arg10[%c0, %c0_0, %c0_1] : memref<2x18x64xf32, #tpu.memory_space<vmem>>, vector<2x1x64xf32>
    tpu.vector_store %arg10[%c0, %c0_0, %c0_1], %0 {strides = array<i32>} : memref<2x18x64xf32, #tpu.memory_space<vmem>>, vector<2x1x64xf32>,
    %cst_2 = arith.constant 0.000000e+00 : f32
    %2 = vector.broadcast %cst_2 : f32 to vector<2x1x64xf32>
    %c0_3 = arith.constant 0 : index
    %c17 = arith.constant 17 : index
    %c0_4 = arith.constant 0 : index
    %3 = vector.load %arg10[%c0_3, %c17, %c0_4] : memref<2x18x64xf32, #tpu.memory_space<vmem>>, vector<2x1x64xf32>
    tpu.vector_store %arg10[%c0_3, %c17, %c0_4], %2 {strides = array<i32>} : memref<2x18x64xf32, #tpu.memory_space<vmem>>, vector<2x1x64xf32>,
    %c0_5 = arith.constant 0 : index
    %c0_6 = arith.constant 0 : index
    %c0_7 = arith.constant 0 : index
    %4 = vector.load %arg1[%c0_5, %c0_6, %c0_7] : memref<2x16x64xf32, #tpu.memory_space<vmem>>, vector<2x16x64xf32>
    %c0_8 = arith.constant 0 : index
    %c1 = arith.constant 1 : index
    %c0_9 = arith.constant 0 : index
    %5 = vector.load %arg10[%c0_8, %c1, %c0_9] : memref<2x18x64xf32, #tpu.memory_space<vmem>>, vector<2x16x64xf32>
    tpu.vector_store %arg10[%c0_8, %c1, %c0_9], %4 {strides = array<i32>} : memref<2x18x64xf32, #tpu.memory_space<vmem>>, vector<2x16x64xf32>,
    %c0_10 = arith.constant 0 : index
    %c0_11 = arith.constant 0 : index
    %c0_12 = arith.constant 0 : index
    %6 = vector.load %arg10[%c0_10, %c0_11, %c0_12] : memref<2x18x64xf32, #tpu.memory_space<vmem>>, vector<1x18x64xf32>
    %7 = vector.shape_cast %6 : vector<1x18x64xf32> to vector<18x64xf32>
    %8 = vector.extract_strided_slice %7 {offsets = [0, 0], sizes = [16, 64], strides = [1, 1]} : vector<18x64xf32> to vector<16x64xf32>
    %c0_13 = arith.constant 0 : index
    %c0_14 = arith.constant 0 : index
    %c0_15 = arith.constant 0 : index
    %9 = vector.load %arg3[%c0_13, %c0_14, %c0_15] : memref<3x64x128xf32, #tpu.memory_space<vmem>>, vector<1x64x128xf32>
    %10 = vector.shape_cast %9 : vector<1x64x128xf32> to vector<64x128xf32>
    %cst_16 = arith.constant dense<0.000000e+00> : vector<16x128xf32>
    %11 = tpu.matmul %8, %10, %cst_16 {dimension_numbers = #tpu.dot_dimension_numbers<[1], [0], [0], [1], [0, 0, 1, 1], [], []>} : vector<16x64xf32>, vector<64x128xf32>, vector<16x128xf32> -> vector<16x128xf32>
    %12 = vector.extract_strided_slice %7 {offsets = [1, 0], sizes = [16, 64], strides = [1, 1]} : vector<18x64xf32> to vector<16x64xf32>
    %c1_17 = arith.constant 1 : index
    %c0_18 = arith.constant 0 : index
    %c0_19 = arith.constant 0 : index
    %13 = vector.load %arg3[%c1_17, %c0_18, %c0_19] : memref<3x64x128xf32, #tpu.memory_space<vmem>>, vector<1x64x128xf32>
    %14 = vector.shape_cast %13 : vector<1x64x128xf32> to vector<64x128xf32>
    %cst_20 = arith.constant dense<0.000000e+00> : vector<16x128xf32>
    %15 = tpu.matmul %12, %14, %cst_20 {dimension_numbers = #tpu.dot_dimension_numbers<[1], [0], [0], [1], [0, 0, 1, 1], [], []>} : vector<16x64xf32>, vector<64x128xf32>, vector<16x128xf32> -> vector<16x128xf32>
    %16 = arith.addf %11, %15 : vector<16x128xf32>
    %17 = vector.extract_strided_slice %7 {offsets = [2, 0], sizes = [16, 64], strides = [1, 1]} : vector<18x64xf32> to vector<16x64xf32>
    %c2 = arith.constant 2 : index
    %c0_21 = arith.constant 0 : index
    %c0_22 = arith.constant 0 : index
    %18 = vector.load %arg3[%c2, %c0_21, %c0_22] : memref<3x64x128xf32, #tpu.memory_space<vmem>>, vector<1x64x128xf32>
    %19 = vector.shape_cast %18 : vector<1x64x128xf32> to vector<64x128xf32>
    %cst_23 = arith.constant dense<0.000000e+00> : vector<16x128xf32>
    %20 = tpu.matmul %17, %19, %cst_23 {dimension_numbers = #tpu.dot_dimension_numbers<[1], [0], [0], [1], [0, 0, 1, 1], [], []>} : vector<16x64xf32>, vector<64x128xf32>, vector<16x128xf32> -> vector<16x128xf32>
    %21 = arith.addf %16, %20 : vector<16x128xf32>
    %c0_24 = arith.constant 0 : index
    %c0_25 = arith.constant 0 : index
    %22 = vector.load %arg4[%c0_24, %c0_25] : memref<1x128xf32, #tpu.memory_space<vmem>>, vector<1x128xf32>
    %23 = vector.broadcast %22 : vector<1x128xf32> to vector<16x128xf32>
    %24 = arith.addf %21, %23 : vector<16x128xf32>
    %c0_26 = arith.constant 0 : index
    %c0_27 = arith.constant 0 : index
    %c0_28 = arith.constant 0 : index
    %25 = vector.load %arg2[%c0_26, %c0_27, %c0_28] : memref<2x16x128xf32, #tpu.memory_space<vmem>>, vector<1x16x128xf32>
    %26 = vector.shape_cast %25 : vector<1x16x128xf32> to vector<16x128xf32>
    %27 = arith.addf %24, %26 : vector<16x128xf32>
    %c1_29 = arith.constant 1 : index
    %c0_30 = arith.constant 0 : index
    %c0_31 = arith.constant 0 : index
    %28 = vector.load %arg10[%c1_29, %c0_30, %c0_31] : memref<2x18x64xf32, #tpu.memory_space<vmem>>, vector<1x18x64xf32>
    %29 = vector.shape_cast %28 : vector<1x18x64xf32> to vector<18x64xf32>
    %30 = vector.extract_strided_slice %29 {offsets = [0, 0], sizes = [16, 64], strides = [1, 1]} : vector<18x64xf32> to vector<16x64xf32>
    %c0_32 = arith.constant 0 : index
    %c0_33 = arith.constant 0 : index
    %c0_34 = arith.constant 0 : index
    %31 = vector.load %arg3[%c0_32, %c0_33, %c0_34] : memref<3x64x128xf32, #tpu.memory_space<vmem>>, vector<1x64x128xf32>
    %32 = vector.shape_cast %31 : vector<1x64x128xf32> to vector<64x128xf32>
    %cst_35 = arith.constant dense<0.000000e+00> : vector<16x128xf32>
    %33 = tpu.matmul %30, %32, %cst_35 {dimension_numbers = #tpu.dot_dimension_numbers<[1], [0], [0], [1], [0, 0, 1, 1], [], []>} : vector<16x64xf32>, vector<64x128xf32>, vector<16x128xf32> -> vector<16x128xf32>
    %34 = vector.extract_strided_slice %29 {offsets = [1, 0], sizes = [16, 64], strides = [1, 1]} : vector<18x64xf32> to vector<16x64xf32>
    %c1_36 = arith.constant 1 : index
    %c0_37 = arith.constant 0 : index
    %c0_38 = arith.constant 0 : index
    %35 = vector.load %arg3[%c1_36, %c0_37, %c0_38] : memref<3x64x128xf32, #tpu.memory_space<vmem>>, vector<1x64x128xf32>
    %36 = vector.shape_cast %35 : vector<1x64x128xf32> to vector<64x128xf32>
    %cst_39 = arith.constant dense<0.000000e+00> : vector<16x128xf32>
    %37 = tpu.matmul %34, %36, %cst_39 {dimension_numbers = #tpu.dot_dimension_numbers<[1], [0], [0], [1], [0, 0, 1, 1], [], []>} : vector<16x64xf32>, vector<64x128xf32>, vector<16x128xf32> -> vector<16x128xf32>
    %38 = arith.addf %33, %37 : vector<16x128xf32>
    %39 = vector.extract_strided_slice %29 {offsets = [2, 0], sizes = [16, 64], strides = [1, 1]} : vector<18x64xf32> to vector<16x64xf32>
    %c2_40 = arith.constant 2 : index
    %c0_41 = arith.constant 0 : index
    %c0_42 = arith.constant 0 : index
    %40 = vector.load %arg3[%c2_40, %c0_41, %c0_42] : memref<3x64x128xf32, #tpu.memory_space<vmem>>, vector<1x64x128xf32>
    %41 = vector.shape_cast %40 : vector<1x64x128xf32> to vector<64x128xf32>
    %cst_43 = arith.constant dense<0.000000e+00> : vector<16x128xf32>
    %42 = tpu.matmul %39, %41, %cst_43 {dimension_numbers = #tpu.dot_dimension_numbers<[1], [0], [0], [1], [0, 0, 1, 1], [], []>} : vector<16x64xf32>, vector<64x128xf32>, vector<16x128xf32> -> vector<16x128xf32>
    %43 = arith.addf %38, %42 : vector<16x128xf32>
    %c0_44 = arith.constant 0 : index
    %c0_45 = arith.constant 0 : index
    %44 = vector.load %arg4[%c0_44, %c0_45] : memref<1x128xf32, #tpu.memory_space<vmem>>, vector<1x128xf32>
    %45 = vector.broadcast %44 : vector<1x128xf32> to vector<16x128xf32>
    %46 = arith.addf %43, %45 : vector<16x128xf32>
    %c1_46 = arith.constant 1 : index
    %c0_47 = arith.constant 0 : index
    %c0_48 = arith.constant 0 : index
    %47 = vector.load %arg2[%c1_46, %c0_47, %c0_48] : memref<2x16x128xf32, #tpu.memory_space<vmem>>, vector<1x16x128xf32>
    %48 = vector.shape_cast %47 : vector<1x16x128xf32> to vector<16x128xf32>
    %49 = arith.addf %46, %48 : vector<16x128xf32>
    %50 = tpu.iota {dimensions = array<i32: 0>} : vector<128x128xi32>
    %51 = tpu.iota {dimensions = array<i32: 1>} : vector<128x128xi32>
    %c8_i32 = arith.constant 8 : i32
    %c0_i32 = arith.constant 0 : i32
    %52 = arith.cmpi eq, %c8_i32, %c0_i32 : i32
    %c1_i32 = arith.constant 1 : i32
    %53 = arith.select %52, %c1_i32, %c8_i32 : i32
    %54 = vector.broadcast %53 : i32 to vector<128x128xi32>
    %55 = arith.remsi %50, %54 : vector<128x128xi32>
    %c0_i32_49 = arith.constant 0 : i32
    %56 = vector.broadcast %c0_i32_49 : i32 to vector<128x128xi32>
    %57 = arith.cmpi ne, %55, %56 : vector<128x128xi32>
    %c0_i32_50 = arith.constant 0 : i32
    %58 = vector.broadcast %c0_i32_50 : i32 to vector<128x128xi32>
    %59 = arith.cmpi slt, %55, %58 : vector<128x128xi32>
    %c0_i32_51 = arith.constant 0 : i32
    %60 = arith.cmpi slt, %53, %c0_i32_51 : i32
    %61 = vector.broadcast %60 : i1 to vector<128x128xi1>
    %62 = vector.broadcast %61 : vector<128x128xi1> to vector<128x128xi1>
    %63 = arith.xori %59, %62 : vector<128x128xi1>
    %64 = arith.andi %63, %57 : vector<128x128xi1>
    %65 = vector.broadcast %53 : i32 to vector<128x128xi32>
    %66 = arith.addi %55, %65 : vector<128x128xi32>
    %67 = arith.select %64, %66, %55 : vector<128x128xi1>, vector<128x128xi32>
    %c8_i32_52 = arith.constant 8 : i32
    %c0_i32_53 = arith.constant 0 : i32
    %68 = arith.cmpi eq, %c8_i32_52, %c0_i32_53 : i32
    %c1_i32_54 = arith.constant 1 : i32
    %69 = arith.select %68, %c1_i32_54, %c8_i32_52 : i32
    %70 = vector.broadcast %69 : i32 to vector<128x128xi32>
    %71 = arith.remsi %51, %70 : vector<128x128xi32>
    %c0_i32_55 = arith.constant 0 : i32
    %72 = vector.broadcast %c0_i32_55 : i32 to vector<128x128xi32>
    %73 = arith.cmpi ne, %71, %72 : vector<128x128xi32>
    %c0_i32_56 = arith.constant 0 : i32
    %74 = vector.broadcast %c0_i32_56 : i32 to vector<128x128xi32>
    %75 = arith.cmpi slt, %71, %74 : vector<128x128xi32>
    %c0_i32_57 = arith.constant 0 : i32
    %76 = arith.cmpi slt, %69, %c0_i32_57 : i32
    %77 = vector.broadcast %76 : i1 to vector<128x128xi1>
    %78 = vector.broadcast %77 : vector<128x128xi1> to vector<128x128xi1>
    %79 = arith.xori %75, %78 : vector<128x128xi1>
    %80 = arith.andi %79, %73 : vector<128x128xi1>
    %81 = vector.broadcast %69 : i32 to vector<128x128xi32>
    %82 = arith.addi %71, %81 : vector<128x128xi32>
    %83 = arith.select %80, %82, %71 : vector<128x128xi1>, vector<128x128xi32>
    %84 = arith.cmpi eq, %67, %83 : vector<128x128xi32>
    %85 = arith.extui %84 : vector<128x128xi1> to vector<128x128xi32>
    %86 = arith.sitofp %85 : vector<128x128xi32> to vector<128x128xf32>
    %cst_58 = arith.constant 0.000000e+00 : f32
    %87 = vector.broadcast %cst_58 : f32 to vector<1x128xf32>
    %cst_59 = arith.constant 0.000000e+00 : f32
    %88 = vector.broadcast %cst_59 : f32 to vector<1x128xf32>
    %cst_60 = arith.constant dense<0.000000e+00> : vector<16x128xf32>
    %89 = tpu.matmul %27, %86, %cst_60 {dimension_numbers = #tpu.dot_dimension_numbers<[1], [0], [0], [1], [0, 0, 1, 1], [], []>} : vector<16x128xf32>, vector<128x128xf32>, vector<16x128xf32> -> vector<16x128xf32>
    %cst_61 = arith.constant dense<0.000000e+00> : vector<128xf32>
    %90 = vector.multi_reduction <add>, %89, %cst_61 [0] : vector<16x128xf32> to vector<128xf32>
    %91 = vector.shape_cast %90 : vector<128xf32> to vector<1x128xf32>
    %92 = arith.addf %87, %91 : vector<1x128xf32>
    %93 = arith.mulf %27, %27 : vector<16x128xf32>
    %cst_62 = arith.constant dense<0.000000e+00> : vector<16x128xf32>
    %94 = tpu.matmul %93, %86, %cst_62 {dimension_numbers = #tpu.dot_dimension_numbers<[1], [0], [0], [1], [0, 0, 1, 1], [], []>} : vector<16x128xf32>, vector<128x128xf32>, vector<16x128xf32> -> vector<16x128xf32>
    %cst_63 = arith.constant dense<0.000000e+00> : vector<128xf32>
    %95 = vector.multi_reduction <add>, %94, %cst_63 [0] : vector<16x128xf32> to vector<128xf32>
    %96 = vector.shape_cast %95 : vector<128xf32> to vector<1x128xf32>
    %97 = arith.addf %88, %96 : vector<1x128xf32>
    %cst_64 = arith.constant dense<0.000000e+00> : vector<16x128xf32>
    %98 = tpu.matmul %49, %86, %cst_64 {dimension_numbers = #tpu.dot_dimension_numbers<[1], [0], [0], [1], [0, 0, 1, 1], [], []>} : vector<16x128xf32>, vector<128x128xf32>, vector<16x128xf32> -> vector<16x128xf32>
    %cst_65 = arith.constant dense<0.000000e+00> : vector<128xf32>
    %99 = vector.multi_reduction <add>, %98, %cst_65 [0] : vector<16x128xf32> to vector<128xf32>
    %100 = vector.shape_cast %99 : vector<128xf32> to vector<1x128xf32>
    %101 = arith.addf %92, %100 : vector<1x128xf32>
    %102 = arith.mulf %49, %49 : vector<16x128xf32>
    %cst_66 = arith.constant dense<0.000000e+00> : vector<16x128xf32>
    %103 = tpu.matmul %102, %86, %cst_66 {dimension_numbers = #tpu.dot_dimension_numbers<[1], [0], [0], [1], [0, 0, 1, 1], [], []>} : vector<16x128xf32>, vector<128x128xf32>, vector<16x128xf32> -> vector<16x128xf32>
    %cst_67 = arith.constant dense<0.000000e+00> : vector<128xf32>
    %104 = vector.multi_reduction <add>, %103, %cst_67 [0] : vector<16x128xf32> to vector<128xf32>
    %105 = vector.shape_cast %104 : vector<128xf32> to vector<1x128xf32>
    %106 = arith.addf %97, %105 : vector<1x128xf32>
    %cst_68 = arith.constant 0.001953125 : f32
    %107 = vector.broadcast %cst_68 : f32 to vector<1x128xf32>
    %108 = arith.mulf %101, %107 : vector<1x128xf32>
    %cst_69 = arith.constant 0.001953125 : f32
    %109 = vector.broadcast %cst_69 : f32 to vector<1x128xf32>
    %110 = arith.mulf %106, %109 : vector<1x128xf32>
    %111 = arith.mulf %108, %108 : vector<1x128xf32>
    %112 = arith.subf %110, %111 : vector<1x128xf32>
    %cst_70 = arith.constant 0.000000e+00 : f32
    %113 = vector.broadcast %cst_70 : f32 to vector<1x128xf32>
    %114 = arith.maximumf %112, %113 : vector<1x128xf32>
    %c0_71 = arith.constant 0 : index
    %c0_72 = arith.constant 0 : index
    %115 = vector.load %arg5[%c0_71, %c0_72] : memref<1x128xf32, #tpu.memory_space<vmem>>, vector<1x128xf32>
    %cst_73 = arith.constant 9.99999974E-6 : f32
    %116 = vector.broadcast %cst_73 : f32 to vector<1x128xf32>
    %117 = arith.addf %114, %116 : vector<1x128xf32>
    %118 = math.rsqrt %117 : vector<1x128xf32>
    %119 = arith.mulf %115, %118 : vector<1x128xf32>
    %c0_74 = arith.constant 0 : index
    %c0_75 = arith.constant 0 : index
    %120 = vector.load %arg6[%c0_74, %c0_75] : memref<1x128xf32, #tpu.memory_space<vmem>>, vector<1x128xf32>
    %121 = arith.mulf %108, %119 : vector<1x128xf32>
    %122 = arith.subf %120, %121 : vector<1x128xf32>
    %cst_76 = arith.constant 0.000000e+00 : f32
    %123 = vector.broadcast %cst_76 : f32 to vector<2x1x128xf32>
    %c0_77 = arith.constant 0 : index
    %c0_78 = arith.constant 0 : index
    %c0_79 = arith.constant 0 : index
    %124 = vector.load %arg11[%c0_77, %c0_78, %c0_79] : memref<2x18x128xf32, #tpu.memory_space<vmem>>, vector<2x1x128xf32>
    tpu.vector_store %arg11[%c0_77, %c0_78, %c0_79], %123 {strides = array<i32>} : memref<2x18x128xf32, #tpu.memory_space<vmem>>, vector<2x1x128xf32>,
    %cst_80 = arith.constant 0.000000e+00 : f32
    %125 = vector.broadcast %cst_80 : f32 to vector<2x1x128xf32>
    %c0_81 = arith.constant 0 : index
    %c17_82 = arith.constant 17 : index
    %c0_83 = arith.constant 0 : index
    %126 = vector.load %arg11[%c0_81, %c17_82, %c0_83] : memref<2x18x128xf32, #tpu.memory_space<vmem>>, vector<2x1x128xf32>
    tpu.vector_store %arg11[%c0_81, %c17_82, %c0_83], %125 {strides = array<i32>} : memref<2x18x128xf32, #tpu.memory_space<vmem>>, vector<2x1x128xf32>,
    %127 = vector.broadcast %119 : vector<1x128xf32> to vector<16x128xf32>
    %128 = arith.mulf %27, %127 : vector<16x128xf32>
    %129 = vector.broadcast %122 : vector<1x128xf32> to vector<16x128xf32>
    %130 = arith.addf %128, %129 : vector<16x128xf32>
    %cst_84 = arith.constant 0.000000e+00 : f32
    %131 = vector.broadcast %cst_84 : f32 to vector<16x128xf32>
    %132 = arith.maximumf %130, %131 : vector<16x128xf32>
    %133 = vector.shape_cast %132 : vector<16x128xf32> to vector<1x16x128xf32>
    %c0_85 = arith.constant 0 : index
    %c1_86 = arith.constant 1 : index
    %c0_87 = arith.constant 0 : index
    %134 = vector.load %arg11[%c0_85, %c1_86, %c0_87] : memref<2x18x128xf32, #tpu.memory_space<vmem>>, vector<1x16x128xf32>
    tpu.vector_store %arg11[%c0_85, %c1_86, %c0_87], %133 {strides = array<i32>} : memref<2x18x128xf32, #tpu.memory_space<vmem>>, vector<1x16x128xf32>,
    %135 = vector.broadcast %119 : vector<1x128xf32> to vector<16x128xf32>
    %136 = arith.mulf %49, %135 : vector<16x128xf32>
    %137 = vector.broadcast %122 : vector<1x128xf32> to vector<16x128xf32>
    %138 = arith.addf %136, %137 : vector<16x128xf32>
    %cst_88 = arith.constant 0.000000e+00 : f32
    %139 = vector.broadcast %cst_88 : f32 to vector<16x128xf32>
    %140 = arith.maximumf %138, %139 : vector<16x128xf32>
    %141 = vector.shape_cast %140 : vector<16x128xf32> to vector<1x16x128xf32>
    %c1_89 = arith.constant 1 : index
    %c1_90 = arith.constant 1 : index
    %c0_91 = arith.constant 0 : index
    %142 = vector.load %arg11[%c1_89, %c1_90, %c0_91] : memref<2x18x128xf32, #tpu.memory_space<vmem>>, vector<1x16x128xf32>
    tpu.vector_store %arg11[%c1_89, %c1_90, %c0_91], %141 {strides = array<i32>} : memref<2x18x128xf32, #tpu.memory_space<vmem>>, vector<1x16x128xf32>,
    %c0_92 = arith.constant 0 : index
    %c0_93 = arith.constant 0 : index
    %c0_94 = arith.constant 0 : index
    %143 = vector.load %arg11[%c0_92, %c0_93, %c0_94] : memref<2x18x128xf32, #tpu.memory_space<vmem>>, vector<1x18x128xf32>
    %144 = vector.shape_cast %143 : vector<1x18x128xf32> to vector<18x128xf32>
    %145 = vector.extract_strided_slice %144 {offsets = [0, 0], sizes = [16, 128], strides = [1, 1]} : vector<18x128xf32> to vector<16x128xf32>
    %c0_95 = arith.constant 0 : index
    %c0_96 = arith.constant 0 : index
    %c0_97 = arith.constant 0 : index
    %146 = vector.load %arg7[%c0_95, %c0_96, %c0_97] : memref<3x128x128xf32, #tpu.memory_space<vmem>>, vector<1x128x128xf32>
    %147 = vector.shape_cast %146 : vector<1x128x128xf32> to vector<128x128xf32>
    %cst_98 = arith.constant dense<0.000000e+00> : vector<16x128xf32>
    %148 = tpu.matmul %145, %147, %cst_98 {dimension_numbers = #tpu.dot_dimension_numbers<[1], [0], [0], [1], [0, 0, 1, 1], [], []>} : vector<16x128xf32>, vector<128x128xf32>, vector<16x128xf32> -> vector<16x128xf32>
    %149 = vector.extract_strided_slice %144 {offsets = [1, 0], sizes = [16, 128], strides = [1, 1]} : vector<18x128xf32> to vector<16x128xf32>
    %c1_99 = arith.constant 1 : index
    %c0_100 = arith.constant 0 : index
    %c0_101 = arith.constant 0 : index
    %150 = vector.load %arg7[%c1_99, %c0_100, %c0_101] : memref<3x128x128xf32, #tpu.memory_space<vmem>>, vector<1x128x128xf32>
    %151 = vector.shape_cast %150 : vector<1x128x128xf32> to vector<128x128xf32>
    %cst_102 = arith.constant dense<0.000000e+00> : vector<16x128xf32>
    %152 = tpu.matmul %149, %151, %cst_102 {dimension_numbers = #tpu.dot_dimension_numbers<[1], [0], [0], [1], [0, 0, 1, 1], [], []>} : vector<16x128xf32>, vector<128x128xf32>, vector<16x128xf32> -> vector<16x128xf32>
    %153 = arith.addf %148, %152 : vector<16x128xf32>
    %154 = vector.extract_strided_slice %144 {offsets = [2, 0], sizes = [16, 128], strides = [1, 1]} : vector<18x128xf32> to vector<16x128xf32>
    %c2_103 = arith.constant 2 : index
    %c0_104 = arith.constant 0 : index
    %c0_105 = arith.constant 0 : index
    %155 = vector.load %arg7[%c2_103, %c0_104, %c0_105] : memref<3x128x128xf32, #tpu.memory_space<vmem>>, vector<1x128x128xf32>
    %156 = vector.shape_cast %155 : vector<1x128x128xf32> to vector<128x128xf32>
    %cst_106 = arith.constant dense<0.000000e+00> : vector<16x128xf32>
    %157 = tpu.matmul %154, %156, %cst_106 {dimension_numbers = #tpu.dot_dimension_numbers<[1], [0], [0], [1], [0, 0, 1, 1], [], []>} : vector<16x128xf32>, vector<128x128xf32>, vector<16x128xf32> -> vector<16x128xf32>
    %158 = arith.addf %153, %157 : vector<16x128xf32>
    %c0_107 = arith.constant 0 : index
    %c0_108 = arith.constant 0 : index
    %159 = vector.load %arg8[%c0_107, %c0_108] : memref<1x128xf32, #tpu.memory_space<vmem>>, vector<1x128xf32>
    %160 = vector.broadcast %159 : vector<1x128xf32> to vector<16x128xf32>
    %161 = arith.addf %158, %160 : vector<16x128xf32>
    %162 = vector.shape_cast %161 : vector<16x128xf32> to vector<1x16x128xf32>
    %c0_109 = arith.constant 0 : index
    %c0_110 = arith.constant 0 : index
    %c0_111 = arith.constant 0 : index
    %163 = vector.load %arg9[%c0_109, %c0_110, %c0_111] : memref<2x16x128xf32, #tpu.memory_space<vmem>>, vector<1x16x128xf32>
    tpu.vector_store %arg9[%c0_109, %c0_110, %c0_111], %162 {strides = array<i32>} : memref<2x16x128xf32, #tpu.memory_space<vmem>>, vector<1x16x128xf32>,
    %c1_112 = arith.constant 1 : index
    %c0_113 = arith.constant 0 : index
    %c0_114 = arith.constant 0 : index
    %164 = vector.load %arg11[%c1_112, %c0_113, %c0_114] : memref<2x18x128xf32, #tpu.memory_space<vmem>>, vector<1x18x128xf32>
    %165 = vector.shape_cast %164 : vector<1x18x128xf32> to vector<18x128xf32>
    %166 = vector.extract_strided_slice %165 {offsets = [0, 0], sizes = [16, 128], strides = [1, 1]} : vector<18x128xf32> to vector<16x128xf32>
    %c0_115 = arith.constant 0 : index
    %c0_116 = arith.constant 0 : index
    %c0_117 = arith.constant 0 : index
    %167 = vector.load %arg7[%c0_115, %c0_116, %c0_117] : memref<3x128x128xf32, #tpu.memory_space<vmem>>, vector<1x128x128xf32>
    %168 = vector.shape_cast %167 : vector<1x128x128xf32> to vector<128x128xf32>
    %cst_118 = arith.constant dense<0.000000e+00> : vector<16x128xf32>
    %169 = tpu.matmul %166, %168, %cst_118 {dimension_numbers = #tpu.dot_dimension_numbers<[1], [0], [0], [1], [0, 0, 1, 1], [], []>} : vector<16x128xf32>, vector<128x128xf32>, vector<16x128xf32> -> vector<16x128xf32>
    %170 = vector.extract_strided_slice %165 {offsets = [1, 0], sizes = [16, 128], strides = [1, 1]} : vector<18x128xf32> to vector<16x128xf32>
    %c1_119 = arith.constant 1 : index
    %c0_120 = arith.constant 0 : index
    %c0_121 = arith.constant 0 : index
    %171 = vector.load %arg7[%c1_119, %c0_120, %c0_121] : memref<3x128x128xf32, #tpu.memory_space<vmem>>, vector<1x128x128xf32>
    %172 = vector.shape_cast %171 : vector<1x128x128xf32> to vector<128x128xf32>
    %cst_122 = arith.constant dense<0.000000e+00> : vector<16x128xf32>
    %173 = tpu.matmul %170, %172, %cst_122 {dimension_numbers = #tpu.dot_dimension_numbers<[1], [0], [0], [1], [0, 0, 1, 1], [], []>} : vector<16x128xf32>, vector<128x128xf32>, vector<16x128xf32> -> vector<16x128xf32>
    %174 = arith.addf %169, %173 : vector<16x128xf32>
    %175 = vector.extract_strided_slice %165 {offsets = [2, 0], sizes = [16, 128], strides = [1, 1]} : vector<18x128xf32> to vector<16x128xf32>
    %c2_123 = arith.constant 2 : index
    %c0_124 = arith.constant 0 : index
    %c0_125 = arith.constant 0 : index
    %176 = vector.load %arg7[%c2_123, %c0_124, %c0_125] : memref<3x128x128xf32, #tpu.memory_space<vmem>>, vector<1x128x128xf32>
    %177 = vector.shape_cast %176 : vector<1x128x128xf32> to vector<128x128xf32>
    %cst_126 = arith.constant dense<0.000000e+00> : vector<16x128xf32>
    %178 = tpu.matmul %175, %177, %cst_126 {dimension_numbers = #tpu.dot_dimension_numbers<[1], [0], [0], [1], [0, 0, 1, 1], [], []>} : vector<16x128xf32>, vector<128x128xf32>, vector<16x128xf32> -> vector<16x128xf32>
    %179 = arith.addf %174, %178 : vector<16x128xf32>
    %c0_127 = arith.constant 0 : index
    %c0_128 = arith.constant 0 : index
    %180 = vector.load %arg8[%c0_127, %c0_128] : memref<1x128xf32, #tpu.memory_space<vmem>>, vector<1x128xf32>
    %181 = vector.broadcast %180 : vector<1x128xf32> to vector<16x128xf32>
    %182 = arith.addf %179, %181 : vector<16x128xf32>
    %183 = vector.shape_cast %182 : vector<16x128xf32> to vector<1x16x128xf32>
    %c1_129 = arith.constant 1 : index
    %c0_130 = arith.constant 0 : index
    %c0_131 = arith.constant 0 : index
    %184 = vector.load %arg9[%c1_129, %c0_130, %c0_131] : memref<2x16x128xf32, #tpu.memory_space<vmem>>, vector<1x16x128xf32>
    tpu.vector_store %arg9[%c1_129, %c0_130, %c0_131], %183 {strides = array<i32>} : memref<2x16x128xf32, #tpu.memory_space<vmem>>, vector<1x16x128xf32>,
    return
  }
  func.func @transform_0(%arg0: i32) -> (i32, i32, i32) {
    %c0_i32 = arith.constant 0 : i32
    %c0_i32_0 = arith.constant 0 : i32
    %c0_i32_1 = arith.constant 0 : i32
    %c0_i32_2 = arith.constant 0 : i32
    return %c0_i32, %c0_i32_0, %c0_i32_1 : i32, i32, i32
  }
  func.func @transform_1(%arg0: i32) -> (i32, i32, i32) {
    %c0_i32 = arith.constant 0 : i32
    %c0_i32_0 = arith.constant 0 : i32
    %c0_i32_1 = arith.constant 0 : i32
    %c0_i32_2 = arith.constant 0 : i32
    return %c0_i32, %c0_i32_0, %c0_i32_1 : i32, i32, i32
  }
  func.func @transform_2(%arg0: i32) -> (i32, i32, i32) {
    %c0_i32 = arith.constant 0 : i32
    %c0_i32_0 = arith.constant 0 : i32
    %c0_i32_1 = arith.constant 0 : i32
    %c0_i32_2 = arith.constant 0 : i32
    return %c0_i32, %c0_i32_0, %c0_i32_1 : i32, i32, i32
  }
  func.func @transform_3(%arg0: i32) -> (i32, i32) {
    %c0_i32 = arith.constant 0 : i32
    %c0_i32_0 = arith.constant 0 : i32
    %c0_i32_1 = arith.constant 0 : i32
    return %c0_i32, %c0_i32_0 : i32, i32
  }
  func.func @transform_4(%arg0: i32) -> (i32, i32) {
    %c0_i32 = arith.constant 0 : i32
    %c0_i32_0 = arith.constant 0 : i32
    %c0_i32_1 = arith.constant 0 : i32
    return %c0_i32, %c0_i32_0 : i32, i32
  }
  func.func @transform_5(%arg0: i32) -> (i32, i32) {
    %c0_i32 = arith.constant 0 : i32
    %c0_i32_0 = arith.constant 0 : i32
    %c0_i32_1 = arith.constant 0 : i32
    return %c0_i32, %c0_i32_0 : i32, i32
  }
  func.func @transform_6(%arg0: i32) -> (i32, i32, i32) {
    %c0_i32 = arith.constant 0 : i32
    %c0_i32_0 = arith.constant 0 : i32
    %c0_i32_1 = arith.constant 0 : i32
    %c0_i32_2 = arith.constant 0 : i32
    return %c0_i32, %c0_i32_0, %c0_i32_1 : i32, i32, i32
  }
  func.func @transform_7(%arg0: i32) -> (i32, i32) {
    %c0_i32 = arith.constant 0 : i32
    %c0_i32_0 = arith.constant 0 : i32
    %c0_i32_1 = arith.constant 0 : i32
    return %c0_i32, %c0_i32_0 : i32, i32
  }
  func.func @transform_8(%arg0: i32) -> (i32, i32, i32) {
    %c0_i32 = arith.constant 0 : i32
    %c0_i32_0 = arith.constant 0 : i32
    %c0_i32_1 = arith.constant 0 : i32
    %c0_i32_2 = arith.constant 0 : i32
    return %c0_i32, %c0_i32_0, %c0_i32_1 : i32, i32, i32
  }
}

</mosaic_0001>

<llo_original>
// kernel: concatenation_forward.1
$region0: #{concatenation_forward.1}
  #allocation0 [shape = 'u32[]', space=smem, size = 0x4, offset = 0x4, fixed_abs, tag = 'smem constant byte address 0x4 - core index']
  #allocation1 [shape = 'u32[144,128]{1,0:T(1,128)}', space=vmem, size = 0x12000, scoped, tag = 'internal scratch']
  #allocation2 [shape = 'f32[2,18,64]{2,1,0:T(8,128)}', space=vmem, size = 0x6000, scoped, tag = 'scratch operand']
  #allocation3 [shape = 'f32[2,18,128]{2,1,0:T(8,128)}', space=vmem, size = 0x6000, scoped, tag = 'scratch operand']
  %s0 = inlined_call_operand.vmem [shape: f32[2,16,64], index: 0, kind: input, shape index: {}]
  %s1 = inlined_call_operand.vmem [shape: f32[2,16,128], index: 1, kind: input, shape index: {}]
  %s2 = inlined_call_operand.vmem [shape: f32[3,64,128], index: 2, kind: input, shape index: {}]
  %s3 = inlined_call_operand.vmem [shape: f32[1,128], index: 3, kind: input, shape index: {}]
  %s4 = inlined_call_operand.vmem [shape: f32[1,128], index: 4, kind: input, shape index: {}]
  %s5 = inlined_call_operand.vmem [shape: f32[1,128], index: 5, kind: input, shape index: {}]
  %s6 = inlined_call_operand.vmem [shape: f32[3,128,128], index: 6, kind: input, shape index: {}]
  %s7 = inlined_call_operand.vmem [shape: f32[1,128], index: 7, kind: input, shape index: {}]
  %s8 = inlined_call_operand.vmem [shape: f32[2,16,128], index: 8, kind: output, shape index: {}]
  %s9 = sld [smem:[#allocation0]]
  $region42: #{concatenation_forward.1} parent=0
    _
  %s11 = ssub.s32 1, %s9
  %s12 = scalar_select 0, %s11, %s9
  // Predicated region
  $region2: #{concatenation_forward.1} parent=0 // pred_check
    _
  $region3: #{concatenation_forward.1} parent=0 // pred_check_branch
    %14 = sbr.rel (0) target = $region5
  $region4: #{concatenation_forward.1} parent=0 // pred_region
    _
  $region5: #{concatenation_forward.1} parent=0 // pred_fallthru
    _
  // Predicated region
  $region6: #{concatenation_forward.1} parent=0 // pred_check
    _
  $region7: #{concatenation_forward.1} parent=0 // pred_check_branch
    %16 = sbr.rel (0) target = $region9
  $region8: #{concatenation_forward.1} parent=0 // pred_region
    _
  $region9: #{concatenation_forward.1} parent=0 // pred_fallthru
    _
  // Predicated region
  $region10: #{concatenation_forward.1} parent=0 // pred_check
    _
  $region11: #{concatenation_forward.1} parent=0 // pred_check_branch
    %18 = sbr.rel (0) target = $region13
  $region12: #{concatenation_forward.1} parent=0 // pred_region
    _
  $region13: #{concatenation_forward.1} parent=0 // pred_fallthru
    _
  // Predicated region
  $region14: #{concatenation_forward.1} parent=0 // pred_check
    _
  $region15: #{concatenation_forward.1} parent=0 // pred_check_branch
    %20 = sbr.rel (0) target = $region17
  $region16: #{concatenation_forward.1} parent=0 // pred_region
    _
  $region17: #{concatenation_forward.1} parent=0 // pred_fallthru
    _
  // Predicated region
  $region18: #{concatenation_forward.1} parent=0 // pred_check
    _
  $region19: #{concatenation_forward.1} parent=0 // pred_check_branch
    %22 = sbr.rel (0) target = $region21
  $region20: #{concatenation_forward.1} parent=0 // pred_region
    _
  $region21: #{concatenation_forward.1} parent=0 // pred_fallthru
    _
  // Predicated region
  $region22: #{concatenation_forward.1} parent=0 // pred_check
    _
  $region23: #{concatenation_forward.1} parent=0 // pred_check_branch
    %24 = sbr.rel (0) target = $region25
  $region24: #{concatenation_forward.1} parent=0 // pred_region
    _
  $region25: #{concatenation_forward.1} parent=0 // pred_fallthru
    _
  // Predicated region
  $region26: #{concatenation_forward.1} parent=0 // pred_check
    _
  $region27: #{concatenation_forward.1} parent=0 // pred_check_branch
    %26 = sbr.rel (0) target = $region29
  $region28: #{concatenation_forward.1} parent=0 // pred_region
    _
  $region29: #{concatenation_forward.1} parent=0 // pred_fallthru
    _
  // Predicated region
  $region30: #{concatenation_forward.1} parent=0 // pred_check
    _
  $region31: #{concatenation_forward.1} parent=0 // pred_check_branch
    %28 = sbr.rel (0) target = $region33
  $region32: #{concatenation_forward.1} parent=0 // pred_region
    _
  $region33: #{concatenation_forward.1} parent=0 // pred_fallthru
    _
  %vm29 = vcmask 516096
  %30 = vst.msk [vmem:[#allocation2] sm:$0x1] %vm29, 0.0
  %31 = vst.msk [vmem:[#allocation2 + $0x18] sm:$0x1] %vm29, 0.0
  %32 = vst.msk [vmem:[#allocation2 + $0x11] sm:$0x1] %vm29, 0.0
  %33 = vst.msk [vmem:[#allocation2 + $0x29] sm:$0x1] %vm29, 0.0
  %v34 = vld [vmem:[%s0] sm:$0xff]
  %v35 = vld [vmem:[%s0 + $0x8] sm:$0xff]
  %v36 = vld [vmem:[%s0 + $0x10] sm:$0xff]
  %v37 = vld [vmem:[%s0 + $0x18] sm:$0xff]
  %vm38 = vcmask 523264
  %39 = vst.msk [vmem:[#allocation2 + $0x1] sm:$0xff] %vm38, %v34
  %40 = vst.msk [vmem:[#allocation2 + $0x9] sm:$0xff] %vm38, %v35
  %41 = vst.msk [vmem:[#allocation2 + $0x19] sm:$0xff] %vm38, %v36
  %42 = vst.msk [vmem:[#allocation2 + $0x21] sm:$0xff] %vm38, %v37
  %v43 = vld [vmem:[#allocation2] sm:$0xff]
  %v44 = vld [vmem:[#allocation2 + $0x8] sm:$0xff]
  %v45 = vld [vmem:[#allocation2 + $0x10] sm:$0x3]
  %v46 = vld [vmem:[%s2] sm:$0xff]
  %v47 = vld [vmem:[%s2 + $0x8] sm:$0xff]
  %v48 = vld [vmem:[%s2 + $0x10] sm:$0xff]
  %v49 = vld [vmem:[%s2 + $0x18] sm:$0xff]
  %v50 = vld [vmem:[%s2 + $0x20] sm:$0xff]
  %v51 = vld [vmem:[%s2 + $0x28] sm:$0xff]
  %v52 = vld [vmem:[%s2 + $0x30] sm:$0xff]
  %v53 = vld [vmem:[%s2 + $0x38] sm:$0xff]
  %s54 = scalar_lea.vmem %s2, 64
  %v55 = vld [vmem:[%s54] sm:$0xff]
  %v56 = vld [vmem:[%s54 + $0x8] sm:$0xff]
  %v57 = vld [vmem:[%s54 + $0x10] sm:$0xff]
  %v58 = vld [vmem:[%s54 + $0x18] sm:$0xff]
  %v59 = vld [vmem:[%s54 + $0x20] sm:$0xff]
  %v60 = vld [vmem:[%s54 + $0x28] sm:$0xff]
  %v61 = vld [vmem:[%s54 + $0x30] sm:$0xff]
  %v62 = vld [vmem:[%s54 + $0x38] sm:$0xff]
  %vm66 = vcmask 1046528
  %v67 = vrot.slane %v43, 1
  %v68 = vrot.slane %v44, 1
  %v69 = vsel %vm66, %v67, %v68
  %v70 = vrot.slane %v45, 1
  %v71 = vsel %vm66, %v68, %v70
  %v72 = vsel %vm38, %v69, 0
  %v74 = vsel %vm38, %v71, 0
  %76 = vmatprep.subr.mxu0 0.0
  %77 = vmatpush1.msra.mxu0 %v55
  %78 = vmatprep.subr.mxu0 0.0
  %79 = vmatpush1.msra.mxu0 %v56
  %80 = vmatprep.subr.mxu0 0.0
  %81 = vmatpush1.msra.mxu0 %v57
  %82 = vmatprep.subr.mxu0 0.0
  %83 = vmatpush1.msra.mxu0 %v58
  %84 = vmatprep.subr.mxu0 0.0
  %85 = vmatpush1.msra.mxu0 %v59
  %86 = vmatprep.subr.mxu0 0.0
  %87 = vmatpush1.msra.mxu0 %v60
  %88 = vmatprep.subr.mxu0 0.0
  %89 = vmatpush1.msra.mxu0 %v61
  %90 = vmatprep.subr.mxu0 0.0
  %91 = vmatpush1.msra.mxu0 %v62
  %92 = vmatprep.subr.mxu0 0.0
  %93 = vmatpush1.msra.mxu0 0.0
  %94 = vmatprep.subr.mxu0 0.0
  %95 = vmatpush1.msra.mxu0 0.0
  %96 = vmatprep.subr.mxu0 0.0
  %97 = vmatpush1.msra.mxu0 0.0
  %98 = vmatprep.subr.mxu0 0.0
  %99 = vmatpush1.msra.mxu0 0.0
  %100 = vmatprep.subr.mxu0 0.0
  %101 = vmatpush1.msra.mxu0 0.0
  %102 = vmatprep.subr.mxu0 0.0
  %103 = vmatpush1.msra.mxu0 0.0
  %104 = vmatprep.subr.mxu0 0.0
  %105 = vmatpush1.msra.mxu0 0.0
  %106 = vmatprep.subr.mxu0 0.0
  %107 = vmatpush1.msra.mxu0 0.0
  %108 = vmatprep.subr.mxu0 0.0
  %109 = vmatpush1.msra.mxu0 0.0
  %110 = vmatprep.subr.mxu0 0.0
  %111 = vmatpush1.msra.mxu0 0.0
  %112 = vmatprep.subr.mxu0 0.0
  %113 = vmatpush1.msra.mxu0 0.0
  %114 = vmatprep.subr.mxu0 0.0
  %115 = vmatpush1.msra.mxu0 0.0
  %116 = vmatprep.subr.mxu0 0.0
  %117 = vmatpush1.msra.mxu0 0.0
  %118 = vmatprep.subr.mxu0 0.0
  %119 = vmatpush1.msra.mxu0 0.0
  %120 = vmatprep.subr.mxu0 0.0
  %121 = vmatpush1.msra.mxu0 0.0
  %122 = vmatprep.subr.mxu0 0.0
  %123 = vmatpush1.msra.mxu0 0.0
  %124 = vmatprep.subr.mxu0 0.0
  %125 = vmatpush1.msra.mxu0 0.0
  %126 = vmatprep.subr.mxu0 0.0
  %127 = vmatpush1.msra.mxu0 0.0
  %128 = vmatprep.subr.mxu0 0.0
  %129 = vmatpush1.msra.mxu0 0.0
  %130 = vmatprep.subr.mxu0 0.0
  %131 = vmatpush1.msra.mxu0 0.0
  %132 = vmatprep.subr.mxu0 0.0
  %133 = vmatpush1.msra.mxu0 0.0
  %134 = vmatprep.subr.mxu0 0.0
  %135 = vmatpush1.msra.mxu0 0.0
  %136 = vmatprep.subr.mxu0 0.0
  %137 = vmatpush1.msra.mxu0 0.0
  %138 = vmatprep.subr.mxu0 0.0
  %139 = vmatpush1.msra.mxu0 0.0
  %140 = vmatprep.mubr.f32.mxu0 0.0
  %141 = vmatmul.mubr.f32.gmra.mrb[0].mxu0 %v72
  %v142 = vpop.f32.mrb[0].mxu0
  %v143 = vadd.f32 0.0, %v142
  %v144 = vpop.f32.mrb[0].mxu0
  %145 = vmatprep.mubr.f32.mxu0 0.0
  %146 = vmatmul.mubr.f32.gmra.mrb[0].mxu0 %v74
  %v147 = vpop.f32.mrb[0].mxu0
  %v148 = vadd.f32 0.0, %v147
  %v149 = vpop.f32.mrb[0].mxu0
  %150 = vdwg.mxu0
  %v151 = vsel %vm38, %v43, 0
  %v153 = vsel %vm38, %v44, 0
  %155 = vmatprep.subr.mxu0 0.0
  %156 = vmatpush1.msra.mxu0 %v46
  %157 = vmatprep.subr.mxu0 0.0
  %158 = vmatpush1.msra.mxu0 %v47
  %159 = vmatprep.subr.mxu0 0.0
  %160 = vmatpush1.msra.mxu0 %v48
  %161 = vmatprep.subr.mxu0 0.0
  %162 = vmatpush1.msra.mxu0 %v49
  %163 = vmatprep.subr.mxu0 0.0
  %164 = vmatpush1.msra.mxu0 %v50
  %165 = vmatprep.subr.mxu0 0.0
  %166 = vmatpush1.msra.mxu0 %v51
  %167 = vmatprep.subr.mxu0 0.0
  %168 = vmatpush1.msra.mxu0 %v52
  %169 = vmatprep.subr.mxu0 0.0
  %170 = vmatpush1.msra.mxu0 %v53
  %171 = vmatprep.subr.mxu0 0.0
  %172 = vmatpush1.msra.mxu0 0.0
  %173 = vmatprep.subr.mxu0 0.0
  %174 = vmatpush1.msra.mxu0 0.0
  %175 = vmatprep.subr.mxu0 0.0
  %176 = vmatpush1.msra.mxu0 0.0
  %177 = vmatprep.subr.mxu0 0.0
  %178 = vmatpush1.msra.mxu0 0.0
  %179 = vmatprep.subr.mxu0 0.0
  %180 = vmatpush1.msra.mxu0 0.0
  %181 = vmatprep.subr.mxu0 0.0
  %182 = vmatpush1.msra.mxu0 0.0
  %183 = vmatprep.subr.mxu0 0.0
  %184 = vmatpush1.msra.mxu0 0.0
  %185 = vmatprep.subr.mxu0 0.0
  %186 = vmatpush1.msra.mxu0 0.0
  %187 = vmatprep.subr.mxu0 0.0
  %188 = vmatpush1.msra.mxu0 0.0
  %189 = vmatprep.subr.mxu0 0.0
  %190 = vmatpush1.msra.mxu0 0.0
  %191 = vmatprep.subr.mxu0 0.0
  %192 = vmatpush1.msra.mxu0 0.0
  %193 = vmatprep.subr.mxu0 0.0
  %194 = vmatpush1.msra.mxu0 0.0
  %195 = vmatprep.subr.mxu0 0.0
  %196 = vmatpush1.msra.mxu0 0.0
  %197 = vmatprep.subr.mxu0 0.0
  %198 = vmatpush1.msra.mxu0 0.0
  %199 = vmatprep.subr.mxu0 0.0
  %200 = vmatpush1.msra.mxu0 0.0
  %201 = vmatprep.subr.mxu0 0.0
  %202 = vmatpush1.msra.mxu0 0.0
  %203 = vmatprep.subr.mxu0 0.0
  %204 = vmatpush1.msra.mxu0 0.0
  %205 = vmatprep.subr.mxu0 0.0
  %206 = vmatpush1.msra.mxu0 0.0
  %207 = vmatprep.subr.mxu0 0.0
  %208 = vmatpush1.msra.mxu0 0.0
  %209 = vmatprep.subr.mxu0 0.0
  %210 = vmatpush1.msra.mxu0 0.0
  %211 = vmatprep.subr.mxu0 0.0
  %212 = vmatpush1.msra.mxu0 0.0
  %213 = vmatprep.subr.mxu0 0.0
  %214 = vmatpush1.msra.mxu0 0.0
  %215 = vmatprep.subr.mxu0 0.0
  %216 = vmatpush1.msra.mxu0 0.0
  %217 = vmatprep.subr.mxu0 0.0
  %218 = vmatpush1.msra.mxu0 0.0
  %219 = vmatprep.mubr.f32.mxu0 0.0
  %220 = vmatmul.mubr.f32.gmra.mrb[0].mxu0 %v151
  %v221 = vpop.f32.mrb[0].mxu0
  %v222 = vadd.f32 %v143, %v221
  %v223 = vpop.f32.mrb[0].mxu0
  %224 = vmatprep.mubr.f32.mxu0 0.0
  %225 = vmatmul.mubr.f32.gmra.mrb[0].mxu0 %v153
  %v226 = vpop.f32.mrb[0].mxu0
  %v227 = vadd.f32 %v148, %v226
  %v228 = vpop.f32.mrb[0].mxu0
  %229 = vdwg.mxu0
  %s230 = scalar_lea.vmem %s2, 128
  %v231 = vld [vmem:[%s230] sm:$0xff]
  %v232 = vld [vmem:[%s230 + $0x8] sm:$0xff]
  %v233 = vld [vmem:[%s230 + $0x10] sm:$0xff]
  %v234 = vld [vmem:[%s230 + $0x18] sm:$0xff]
  %v235 = vld [vmem:[%s230 + $0x20] sm:$0xff]
  %v236 = vld [vmem:[%s230 + $0x28] sm:$0xff]
  %v237 = vld [vmem:[%s230 + $0x30] sm:$0xff]
  %v238 = vld [vmem:[%s230 + $0x38] sm:$0xff]
  %vm239 = vcmask 1045504
  %v240 = vrot.slane %v43, 2
  %v241 = vrot.slane %v44, 2
  %v242 = vsel %vm239, %v240, %v241
  %v243 = vrot.slane %v45, 2
  %v244 = vsel %vm239, %v241, %v243
  %v245 = vsel %vm38, %v242, 0
  %v247 = vsel %vm38, %v244, 0
  %249 = vmatprep.subr.mxu0 0.0
  %250 = vmatpush1.msra.mxu0 %v231
  %251 = vmatprep.subr.mxu0 0.0
  %252 = vmatpush1.msra.mxu0 %v232
  %253 = vmatprep.subr.mxu0 0.0
  %254 = vmatpush1.msra.mxu0 %v233
  %255 = vmatprep.subr.mxu0 0.0
  %256 = vmatpush1.msra.mxu0 %v234
  %257 = vmatprep.subr.mxu0 0.0
  %258 = vmatpush1.msra.mxu0 %v235
  %259 = vmatprep.subr.mxu0 0.0
  %260 = vmatpush1.msra.mxu0 %v236
  %261 = vmatprep.subr.mxu0 0.0
  %262 = vmatpush1.msra.mxu0 %v237
  %263 = vmatprep.subr.mxu0 0.0
  %264 = vmatpush1.msra.mxu0 %v238
  %265 = vmatprep.subr.mxu0 0.0
  %266 = vmatpush1.msra.mxu0 0.0
  %267 = vmatprep.subr.mxu0 0.0
  %268 = vmatpush1.msra.mxu0 0.0
  %269 = vmatprep.subr.mxu0 0.0
  %270 = vmatpush1.msra.mxu0 0.0
  %271 = vmatprep.subr.mxu0 0.0
  %272 = vmatpush1.msra.mxu0 0.0
  %273 = vmatprep.subr.mxu0 0.0
  %274 = vmatpush1.msra.mxu0 0.0
  %275 = vmatprep.subr.mxu0 0.0
  %276 = vmatpush1.msra.mxu0 0.0
  %277 = vmatprep.subr.mxu0 0.0
  %278 = vmatpush1.msra.mxu0 0.0
  %279 = vmatprep.subr.mxu0 0.0
  %280 = vmatpush1.msra.mxu0 0.0
  %281 = vmatprep.subr.mxu0 0.0
  %282 = vmatpush1.msra.mxu0 0.0
  %283 = vmatprep.subr.mxu0 0.0
  %284 = vmatpush1.msra.mxu0 0.0
  %285 = vmatprep.subr.mxu0 0.0
  %286 = vmatpush1.msra.mxu0 0.0
  %287 = vmatprep.subr.mxu0 0.0
  %288 = vmatpush1.msra.mxu0 0.0
  %289 = vmatprep.subr.mxu0 0.0
  %290 = vmatpush1.msra.mxu0 0.0
  %291 = vmatprep.subr.mxu0 0.0
  %292 = vmatpush1.msra.mxu0 0.0
  %293 = vmatprep.subr.mxu0 0.0
  %294 = vmatpush1.msra.mxu0 0.0
  %295 = vmatprep.subr.mxu0 0.0
  %296 = vmatpush1.msra.mxu0 0.0
  %297 = vmatprep.subr.mxu0 0.0
  %298 = vmatpush1.msra.mxu0 0.0
  %299 = vmatprep.subr.mxu0 0.0
  %300 = vmatpush1.msra.mxu0 0.0
  %301 = vmatprep.subr.mxu0 0.0
  %302 = vmatpush1.msra.mxu0 0.0
  %303 = vmatprep.subr.mxu0 0.0
  %304 = vmatpush1.msra.mxu0 0.0
  %305 = vmatprep.subr.mxu0 0.0
  %306 = vmatpush1.msra.mxu0 0.0
  %307 = vmatprep.subr.mxu0 0.0
  %308 = vmatpush1.msra.mxu0 0.0
  %309 = vmatprep.subr.mxu0 0.0
  %310 = vmatpush1.msra.mxu0 0.0
  %311 = vmatprep.subr.mxu0 0.0
  %312 = vmatpush1.msra.mxu0 0.0
  %313 = vmatprep.mubr.f32.mxu0 0.0
  %314 = vmatmul.mubr.f32.gmra.mrb[0].mxu0 %v245
  %v315 = vpop.f32.mrb[0].mxu0
  %v316 = vadd.f32 0.0, %v315
  %v317 = vpop.f32.mrb[0].mxu0
  %318 = vmatprep.mubr.f32.mxu0 0.0
  %319 = vmatmul.mubr.f32.gmra.mrb[0].mxu0 %v247
  %v320 = vpop.f32.mrb[0].mxu0
  %v321 = vadd.f32 0.0, %v320
  %v322 = vpop.f32.mrb[0].mxu0
  %323 = vdwg.mxu0
  %v324 = vadd.f32 %v222, %v316
  %v325 = vadd.f32 %v227, %v321
  %v326 = vld [vmem:[%s3] sm:$0x1]
  %v328 = vlaneseq
  %v329 = vshrl.u32 %v328, 7
  %v330 = vsub.s32 0, %v329
  %v331 = vrot.slane %v326, %v330
  %v333 = vadd.f32 %v324, %v331
  %v334 = vadd.f32 %v325, %v331
  %v335 = vld [vmem:[%s1] sm:$0xff]
  %v336 = vld [vmem:[%s1 + $0x8] sm:$0xff]
  %v337 = vadd.f32 %v333, %v335
  %v338 = vadd.f32 %v334, %v336
  %s339 = scalar_lea.vmem [#allocation2], 24
  %v340 = vld [vmem:[%s339] sm:$0xff]
  %v341 = vld [vmem:[%s339 + $0x8] sm:$0xff]
  %v342 = vld [vmem:[%s339 + $0x10] sm:$0x3]
  %v346 = vrot.slane %v340, 1
  %v347 = vrot.slane %v341, 1
  %v348 = vsel %vm66, %v346, %v347
  %v349 = vrot.slane %v342, 1
  %v350 = vsel %vm66, %v347, %v349
  %v351 = vsel %vm38, %v348, 0
  %v353 = vsel %vm38, %v350, 0
  %355 = vmatprep.subr.mxu0 0.0
  %356 = vmatpush1.msra.mxu0 %v55
  %357 = vmatprep.subr.mxu0 0.0
  %358 = vmatpush1.msra.mxu0 %v56
  %359 = vmatprep.subr.mxu0 0.0
  %360 = vmatpush1.msra.mxu0 %v57
  %361 = vmatprep.subr.mxu0 0.0
  %362 = vmatpush1.msra.mxu0 %v58
  %363 = vmatprep.subr.mxu0 0.0
  %364 = vmatpush1.msra.mxu0 %v59
  %365 = vmatprep.subr.mxu0 0.0
  %366 = vmatpush1.msra.mxu0 %v60
  %367 = vmatprep.subr.mxu0 0.0
  %368 = vmatpush1.msra.mxu0 %v61
  %369 = vmatprep.subr.mxu0 0.0
  %370 = vmatpush1.msra.mxu0 %v62
  %371 = vmatprep.subr.mxu0 0.0
  %372 = vmatpush1.msra.mxu0 0.0
  %373 = vmatprep.subr.mxu0 0.0
  %374 = vmatpush1.msra.mxu0 0.0
  %375 = vmatprep.subr.mxu0 0.0
  %376 = vmatpush1.msra.mxu0 0.0
  %377 = vmatprep.subr.mxu0 0.0
  %378 = vmatpush1.msra.mxu0 0.0
  %379 = vmatprep.subr.mxu0 0.0
  %380 = vmatpush1.msra.mxu0 0.0
  %381 = vmatprep.subr.mxu0 0.0
  %382 = vmatpush1.msra.mxu0 0.0
  %383 = vmatprep.subr.mxu0 0.0
  %384 = vmatpush1.msra.mxu0 0.0
  %385 = vmatprep.subr.mxu0 0.0
  %386 = vmatpush1.msra.mxu0 0.0
  %387 = vmatprep.subr.mxu0 0.0
  %388 = vmatpush1.msra.mxu0 0.0
  %389 = vmatprep.subr.mxu0 0.0
  %390 = vmatpush1.msra.mxu0 0.0
  %391 = vmatprep.subr.mxu0 0.0
  %392 = vmatpush1.msra.mxu0 0.0
  %393 = vmatprep.subr.mxu0 0.0
  %394 = vmatpush1.msra.mxu0 0.0
  %395 = vmatprep.subr.mxu0 0.0
  %396 = vmatpush1.msra.mxu0 0.0
  %397 = vmatprep.subr.mxu0 0.0
  %398 = vmatpush1.msra.mxu0 0.0
  %399 = vmatprep.subr.mxu0 0.0
  %400 = vmatpush1.msra.mxu0 0.0
  %401 = vmatprep.subr.mxu0 0.0
  %402 = vmatpush1.msra.mxu0 0.0
  %403 = vmatprep.subr.mxu0 0.0
  %404 = vmatpush1.msra.mxu0 0.0
  %405 = vmatprep.subr.mxu0 0.0
  %406 = vmatpush1.msra.mxu0 0.0
  %407 = vmatprep.subr.mxu0 0.0
  %408 = vmatpush1.msra.mxu0 0.0
  %409 = vmatprep.subr.mxu0 0.0
  %410 = vmatpush1.msra.mxu0 0.0
  %411 = vmatprep.subr.mxu0 0.0
  %412 = vmatpush1.msra.mxu0 0.0
  %413 = vmatprep.subr.mxu0 0.0
  %414 = vmatpush1.msra.mxu0 0.0
  %415 = vmatprep.subr.mxu0 0.0
  %416 = vmatpush1.msra.mxu0 0.0
  %417 = vmatprep.subr.mxu0 0.0
  %418 = vmatpush1.msra.mxu0 0.0
  %419 = vmatprep.mubr.f32.mxu0 0.0
  %420 = vmatmul.mubr.f32.gmra.mrb[0].mxu0 %v351
  %v421 = vpop.f32.mrb[0].mxu0
  %v422 = vadd.f32 0.0, %v421
  %v423 = vpop.f32.mrb[0].mxu0
  %424 = vmatprep.mubr.f32.mxu0 0.0
  %425 = vmatmul.mubr.f32.gmra.mrb[0].mxu0 %v353
  %v426 = vpop.f32.mrb[0].mxu0
  %v427 = vadd.f32 0.0, %v426
  %v428 = vpop.f32.mrb[0].mxu0
  %429 = vdwg.mxu0
  %v430 = vsel %vm38, %v340, 0
  %v432 = vsel %vm38, %v341, 0
  %434 = vmatprep.subr.mxu0 0.0
  %435 = vmatpush1.msra.mxu0 %v46
  %436 = vmatprep.subr.mxu0 0.0
  %437 = vmatpush1.msra.mxu0 %v47
  %438 = vmatprep.subr.mxu0 0.0
  %439 = vmatpush1.msra.mxu0 %v48
  %440 = vmatprep.subr.mxu0 0.0
  %441 = vmatpush1.msra.mxu0 %v49
  %442 = vmatprep.subr.mxu0 0.0
  %443 = vmatpush1.msra.mxu0 %v50
  %444 = vmatprep.subr.mxu0 0.0
  %445 = vmatpush1.msra.mxu0 %v51
  %446 = vmatprep.subr.mxu0 0.0
  %447 = vmatpush1.msra.mxu0 %v52
  %448 = vmatprep.subr.mxu0 0.0
  %449 = vmatpush1.msra.mxu0 %v53
  %450 = vmatprep.subr.mxu0 0.0
  %451 = vmatpush1.msra.mxu0 0.0
  %452 = vmatprep.subr.mxu0 0.0
  %453 = vmatpush1.msra.mxu0 0.0
  %454 = vmatprep.subr.mxu0 0.0
  %455 = vmatpush1.msra.mxu0 0.0
  %456 = vmatprep.subr.mxu0 0.0
  %457 = vmatpush1.msra.mxu0 0.0
  %458 = vmatprep.subr.mxu0 0.0
  %459 = vmatpush1.msra.mxu0 0.0
  %460 = vmatprep.subr.mxu0 0.0
  %461 = vmatpush1.msra.mxu0 0.0
  %462 = vmatprep.subr.mxu0 0.0
  %463 = vmatpush1.msra.mxu0 0.0
  %464 = vmatprep.subr.mxu0 0.0
  %465 = vmatpush1.msra.mxu0 0.0
  %466 = vmatprep.subr.mxu0 0.0
  %467 = vmatpush1.msra.mxu0 0.0
  %468 = vmatprep.subr.mxu0 0.0
  %469 = vmatpush1.msra.mxu0 0.0
  %470 = vmatprep.subr.mxu0 0.0
  %471 = vmatpush1.msra.mxu0 0.0
  %472 = vmatprep.subr.mxu0 0.0
  %473 = vmatpush1.msra.mxu0 0.0
  %474 = vmatprep.subr.mxu0 0.0
  %475 = vmatpush1.msra.mxu0 0.0
  %476 = vmatprep.subr.mxu0 0.0
  %477 = vmatpush1.msra.mxu0 0.0
  %478 = vmatprep.subr.mxu0 0.0
  %479 = vmatpush1.msra.mxu0 0.0
  %480 = vmatprep.subr.mxu0 0.0
  %481 = vmatpush1.msra.mxu0 0.0
  %482 = vmatprep.subr.mxu0 0.0
  %483 = vmatpush1.msra.mxu0 0.0
  %484 = vmatprep.subr.mxu0 0.0
  %485 = vmatpush1.msra.mxu0 0.0
  %486 = vmatprep.subr.mxu0 0.0
  %487 = vmatpush1.msra.mxu0 0.0
  %488 = vmatprep.subr.mxu0 0.0
  %489 = vmatpush1.msra.mxu0 0.0
  %490 = vmatprep.subr.mxu0 0.0
  %491 = vmatpush1.msra.mxu0 0.0
  %492 = vmatprep.subr.mxu0 0.0
  %493 = vmatpush1.msra.mxu0 0.0
  %494 = vmatprep.subr.mxu0 0.0
  %495 = vmatpush1.msra.mxu0 0.0
  %496 = vmatprep.subr.mxu0 0.0
  %497 = vmatpush1.msra.mxu0 0.0
  %498 = vmatprep.mubr.f32.mxu0 0.0
  %499 = vmatmul.mubr.f32.gmra.mrb[0].mxu0 %v430
  %v500 = vpop.f32.mrb[0].mxu0
  %v501 = vadd.f32 %v422, %v500
  %v502 = vpop.f32.mrb[0].mxu0
  %503 = vmatprep.mubr.f32.mxu0 0.0
  %504 = vmatmul.mubr.f32.gmra.mrb[0].mxu0 %v432
  %v505 = vpop.f32.mrb[0].mxu0
  %v506 = vadd.f32 %v427, %v505
  %v507 = vpop.f32.mrb[0].mxu0
  %508 = vdwg.mxu0
  %v509 = vrot.slane %v340, 2
  %v510 = vrot.slane %v341, 2
  %v511 = vsel %vm239, %v509, %v510
  %v512 = vrot.slane %v342, 2
  %v513 = vsel %vm239, %v510, %v512
  %v514 = vsel %vm38, %v511, 0
  %v516 = vsel %vm38, %v513, 0
  %518 = vmatprep.subr.mxu0 0.0
  %519 = vmatpush1.msra.mxu0 %v231
  %520 = vmatprep.subr.mxu0 0.0
  %521 = vmatpush1.msra.mxu0 %v232
  %522 = vmatprep.subr.mxu0 0.0
  %523 = vmatpush1.msra.mxu0 %v233
  %524 = vmatprep.subr.mxu0 0.0
  %525 = vmatpush1.msra.mxu0 %v234
  %526 = vmatprep.subr.mxu0 0.0
  %527 = vmatpush1.msra.mxu0 %v235
  %528 = vmatprep.subr.mxu0 0.0
  %529 = vmatpush1.msra.mxu0 %v236
  %530 = vmatprep.subr.mxu0 0.0
  %531 = vmatpush1.msra.mxu0 %v237
  %532 = vmatprep.subr.mxu0 0.0
  %533 = vmatpush1.msra.mxu0 %v238
  %534 = vmatprep.subr.mxu0 0.0
  %535 = vmatpush1.msra.mxu0 0.0
  %536 = vmatprep.subr.mxu0 0.0
  %537 = vmatpush1.msra.mxu0 0.0
  %538 = vmatprep.subr.mxu0 0.0
  %539 = vmatpush1.msra.mxu0 0.0
  %540 = vmatprep.subr.mxu0 0.0
  %541 = vmatpush1.msra.mxu0 0.0
  %542 = vmatprep.subr.mxu0 0.0
  %543 = vmatpush1.msra.mxu0 0.0
  %544 = vmatprep.subr.mxu0 0.0
  %545 = vmatpush1.msra.mxu0 0.0
  %546 = vmatprep.subr.mxu0 0.0
  %547 = vmatpush1.msra.mxu0 0.0
  %548 = vmatprep.subr.mxu0 0.0
  %549 = vmatpush1.msra.mxu0 0.0
  %550 = vmatprep.subr.mxu0 0.0
  %551 = vmatpush1.msra.mxu0 0.0
  %552 = vmatprep.subr.mxu0 0.0
  %553 = vmatpush1.msra.mxu0 0.0
  %554 = vmatprep.subr.mxu0 0.0
  %555 = vmatpush1.msra.mxu0 0.0
  %556 = vmatprep.subr.mxu0 0.0
  %557 = vmatpush1.msra.mxu0 0.0
  %558 = vmatprep.subr.mxu0 0.0
  %559 = vmatpush1.msra.mxu0 0.0
  %560 = vmatprep.subr.mxu0 0.0
  %561 = vmatpush1.msra.mxu0 0.0
  %562 = vmatprep.subr.mxu0 0.0
  %563 = vmatpush1.msra.mxu0 0.0
  %564 = vmatprep.subr.mxu0 0.0
  %565 = vmatpush1.msra.mxu0 0.0
  %566 = vmatprep.subr.mxu0 0.0
  %567 = vmatpush1.msra.mxu0 0.0
  %568 = vmatprep.subr.mxu0 0.0
  %569 = vmatpush1.msra.mxu0 0.0
  %570 = vmatprep.subr.mxu0 0.0
  %571 = vmatpush1.msra.mxu0 0.0
  %572 = vmatprep.subr.mxu0 0.0
  %573 = vmatpush1.msra.mxu0 0.0
  %574 = vmatprep.subr.mxu0 0.0
  %575 = vmatpush1.msra.mxu0 0.0
  %576 = vmatprep.subr.mxu0 0.0
  %577 = vmatpush1.msra.mxu0 0.0
  %578 = vmatprep.subr.mxu0 0.0
  %579 = vmatpush1.msra.mxu0 0.0
  %580 = vmatprep.subr.mxu0 0.0
  %581 = vmatpush1.msra.mxu0 0.0
  %582 = vmatprep.mubr.f32.mxu0 0.0
  %583 = vmatmul.mubr.f32.gmra.mrb[0].mxu0 %v514
  %v584 = vpop.f32.mrb[0].mxu0
  %v585 = vadd.f32 0.0, %v584
  %v586 = vpop.f32.mrb[0].mxu0
  %587 = vmatprep.mubr.f32.mxu0 0.0
  %588 = vmatmul.mubr.f32.gmra.mrb[0].mxu0 %v516
  %v589 = vpop.f32.mrb[0].mxu0
  %v590 = vadd.f32 0.0, %v589
  %v591 = vpop.f32.mrb[0].mxu0
  %592 = vdwg.mxu0
  %v593 = vadd.f32 %v501, %v585
  %v594 = vadd.f32 %v506, %v590
  %v595 = vadd.f32 %v593, %v331
  %v596 = vadd.f32 %v594, %v331
  %s597 = scalar_lea.vmem %s1, 16
  %v598 = vld [vmem:[%s597] sm:$0xff]
  %v599 = vld [vmem:[%s597 + $0x8] sm:$0xff]
  %v600 = vadd.f32 %v595, %v598
  %v601 = vadd.f32 %v596, %v599
  %v602 = vlaneseq
  %v603 = vshrl.u32 %v602, 7
  %v604 = vadd.s32 %v603, 8
  %v605 = vadd.s32 %v603, 16
  %v606 = vadd.s32 %v603, 24
  %v607 = vadd.s32 %v603, 32
  %v608 = vadd.s32 %v603, 40
  %v609 = vadd.s32 %v603, 48
  %v610 = vadd.s32 %v603, 56
  %v611 = vadd.s32 %v603, 64
  %v612 = vadd.s32 %v603, 72
  %v613 = vadd.s32 %v603, 80
  %v614 = vadd.s32 %v603, 88
  %v615 = vadd.s32 %v603, 96
  %v616 = vadd.s32 %v603, 104
  %v617 = vadd.s32 %v603, 112
  %v618 = vadd.s32 %v603, 120
  %v619 = vlaneseq
  %v620 = vand.u32 %v619, 127
  %vm621 = vcmp.lt.s32.totalorder %v603, 0
  %v622 = vsub.s32 0, %v603
  %v623 = vsel %vm621, %v622, %v603
  %v624 = vshrl.u32 %v623, 3
  %v625 = vand.u32 %v623, 7
  %v626 = vsub.s32 0, %v625
  %v627 = vsel %vm621, %v626, %v625
  %vm628 = vcmp.lt.s32.totalorder %v604, 0
  %v629 = vsub.s32 0, %v604
  %v630 = vsel %vm628, %v629, %v604
  %v631 = vshrl.u32 %v630, 3
  %v632 = vand.u32 %v630, 7
  %v633 = vsub.s32 0, %v632
  %v634 = vsel %vm628, %v633, %v632
  %vm635 = vcmp.lt.s32.totalorder %v605, 0
  %v636 = vsub.s32 0, %v605
  %v637 = vsel %vm635, %v636, %v605
  %v638 = vshrl.u32 %v637, 3
  %v639 = vand.u32 %v637, 7
  %v640 = vsub.s32 0, %v639
  %v641 = vsel %vm635, %v640, %v639
  %vm642 = vcmp.lt.s32.totalorder %v606, 0
  %v643 = vsub.s32 0, %v606
  %v644 = vsel %vm642, %v643, %v606
  %v645 = vshrl.u32 %v644, 3
  %v646 = vand.u32 %v644, 7
  %v647 = vsub.s32 0, %v646
  %v648 = vsel %vm642, %v647, %v646
  %vm649 = vcmp.lt.s32.totalorder %v607, 0
  %v650 = vsub.s32 0, %v607
  %v651 = vsel %vm649, %v650, %v607
  %v652 = vshrl.u32 %v651, 3
  %v653 = vand.u32 %v651, 7
  %v654 = vsub.s32 0, %v653
  %v655 = vsel %vm649, %v654, %v653
  %vm656 = vcmp.lt.s32.totalorder %v608, 0
  %v657 = vsub.s32 0, %v608
  %v658 = vsel %vm656, %v657, %v608
  %v659 = vshrl.u32 %v658, 3
  %v660 = vand.u32 %v658, 7
  %v661 = vsub.s32 0, %v660
  %v662 = vsel %vm656, %v661, %v660
  %vm663 = vcmp.lt.s32.totalorder %v609, 0
  %v664 = vsub.s32 0, %v609
  %v665 = vsel %vm663, %v664, %v609
  %v666 = vshrl.u32 %v665, 3
  %v667 = vand.u32 %v665, 7
  %v668 = vsub.s32 0, %v667
  %v669 = vsel %vm663, %v668, %v667
  %vm670 = vcmp.lt.s32.totalorder %v610, 0
  %v671 = vsub.s32 0, %v610
  %v672 = vsel %vm670, %v671, %v610
  %v673 = vshrl.u32 %v672, 3
  %v674 = vand.u32 %v672, 7
  %v675 = vsub.s32 0, %v674
  %v676 = vsel %vm670, %v675, %v674
  %vm677 = vcmp.lt.s32.totalorder %v611, 0
  %v678 = vsub.s32 0, %v611
  %v679 = vsel %vm677, %v678, %v611
  %v680 = vshrl.u32 %v679, 3
  %v681 = vand.u32 %v679, 7
  %v682 = vsub.s32 0, %v681
  %v683 = vsel %vm677, %v682, %v681
  %vm684 = vcmp.lt.s32.totalorder %v612, 0
  %v685 = vsub.s32 0, %v612
  %v686 = vsel %vm684, %v685, %v612
  %v687 = vshrl.u32 %v686, 3
  %v688 = vand.u32 %v686, 7
  %v689 = vsub.s32 0, %v688
  %v690 = vsel %vm684, %v689, %v688
  %vm691 = vcmp.lt.s32.totalorder %v613, 0
  %v692 = vsub.s32 0, %v613
  %v693 = vsel %vm691, %v692, %v613
  %v694 = vshrl.u32 %v693, 3
  %v695 = vand.u32 %v693, 7
  %v696 = vsub.s32 0, %v695
  %v697 = vsel %vm691, %v696, %v695
  %vm698 = vcmp.lt.s32.totalorder %v614, 0
  %v699 = vsub.s32 0, %v614
  %v700 = vsel %vm698, %v699, %v614
  %v701 = vshrl.u32 %v700, 3
  %v702 = vand.u32 %v700, 7
  %v703 = vsub.s32 0, %v702
  %v704 = vsel %vm698, %v703, %v702
  %vm705 = vcmp.lt.s32.totalorder %v615, 0
  %v706 = vsub.s32 0, %v615
  %v707 = vsel %vm705, %v706, %v615
  %v708 = vshrl.u32 %v707, 3
  %v709 = vand.u32 %v707, 7
  %v710 = vsub.s32 0, %v709
  %v711 = vsel %vm705, %v710, %v709
  %vm712 = vcmp.lt.s32.totalorder %v616, 0
  %v713 = vsub.s32 0, %v616
  %v714 = vsel %vm712, %v713, %v616
  %v715 = vshrl.u32 %v714, 3
  %v716 = vand.u32 %v714, 7
  %v717 = vsub.s32 0, %v716
  %v718 = vsel %vm712, %v717, %v716
  %vm719 = vcmp.lt.s32.totalorder %v617, 0
  %v720 = vsub.s32 0, %v617
  %v721 = vsel %vm719, %v720, %v617
  %v722 = vshrl.u32 %v721, 3
  %v723 = vand.u32 %v721, 7
  %v724 = vsub.s32 0, %v723
  %v725 = vsel %vm719, %v724, %v723
  %vm726 = vcmp.lt.s32.totalorder %v618, 0
  %v727 = vsub.s32 0, %v618
  %v728 = vsel %vm726, %v727, %v618
  %v729 = vshrl.u32 %v728, 3
  %v730 = vand.u32 %v728, 7
  %v731 = vsub.s32 0, %v730
  %v732 = vsel %vm726, %v731, %v730
  %vm733 = vcmp.ne.s32.totalorder %v627, 0
  %vm734 = vcmp.ne.s32.totalorder %v634, 0
  %vm735 = vcmp.ne.s32.totalorder %v641, 0
  %vm736 = vcmp.ne.s32.totalorder %v648, 0
  %vm737 = vcmp.ne.s32.totalorder %v655, 0
  %vm738 = vcmp.ne.s32.totalorder %v662, 0
  %vm739 = vcmp.ne.s32.totalorder %v669, 0
  %vm740 = vcmp.ne.s32.totalorder %v676, 0
  %vm741 = vcmp.ne.s32.totalorder %v683, 0
  %vm742 = vcmp.ne.s32.totalorder %v690, 0
  %vm743 = vcmp.ne.s32.totalorder %v697, 0
  %vm744 = vcmp.ne.s32.totalorder %v704, 0
  %vm745 = vcmp.ne.s32.totalorder %v711, 0
  %vm746 = vcmp.ne.s32.totalorder %v718, 0
  %vm747 = vcmp.ne.s32.totalorder %v725, 0
  %vm748 = vcmp.ne.s32.totalorder %v732, 0
  %vm749 = vcmp.lt.s32.totalorder %v627, 0
  %vm750 = vcmp.lt.s32.totalorder %v634, 0
  %vm751 = vcmp.lt.s32.totalorder %v641, 0
  %vm752 = vcmp.lt.s32.totalorder %v648, 0
  %vm753 = vcmp.lt.s32.totalorder %v655, 0
  %vm754 = vcmp.lt.s32.totalorder %v662, 0
  %vm755 = vcmp.lt.s32.totalorder %v669, 0
  %vm756 = vcmp.lt.s32.totalorder %v676, 0
  %vm757 = vcmp.lt.s32.totalorder %v683, 0
  %vm758 = vcmp.lt.s32.totalorder %v690, 0
  %vm759 = vcmp.lt.s32.totalorder %v697, 0
  %vm760 = vcmp.lt.s32.totalorder %v704, 0
  %vm761 = vcmp.lt.s32.totalorder %v711, 0
  %vm762 = vcmp.lt.s32.totalorder %v718, 0
  %vm763 = vcmp.lt.s32.totalorder %v725, 0
  %vm764 = vcmp.lt.s32.totalorder %v732, 0
  %vm765 = vmand %vm749, %vm733
  %vm766 = vmand %vm750, %vm734
  %vm767 = vmand %vm751, %vm735
  %vm768 = vmand %vm752, %vm736
  %vm769 = vmand %vm753, %vm737
  %vm770 = vmand %vm754, %vm738
  %vm771 = vmand %vm755, %vm739
  %vm772 = vmand %vm756, %vm740
  %vm773 = vmand %vm757, %vm741
  %vm774 = vmand %vm758, %vm742
  %vm775 = vmand %vm759, %vm743
  %vm776 = vmand %vm760, %vm744
  %vm777 = vmand %vm761, %vm745
  %vm778 = vmand %vm762, %vm746
  %vm779 = vmand %vm763, %vm747
  %vm780 = vmand %vm764, %vm748
  %v781 = vadd.s32 %v627, 8
  %v782 = vadd.s32 %v634, 8
  %v783 = vadd.s32 %v641, 8
  %v784 = vadd.s32 %v648, 8
  %v785 = vadd.s32 %v655, 8
  %v786 = vadd.s32 %v662, 8
  %v787 = vadd.s32 %v669, 8
  %v788 = vadd.s32 %v676, 8
  %v789 = vadd.s32 %v683, 8
  %v790 = vadd.s32 %v690, 8
  %v791 = vadd.s32 %v697, 8
  %v792 = vadd.s32 %v704, 8
  %v793 = vadd.s32 %v711, 8
  %v794 = vadd.s32 %v718, 8
  %v795 = vadd.s32 %v725, 8
  %v796 = vadd.s32 %v732, 8
  %v797 = vsel %vm765, %v781, %v627
  %v798 = vsel %vm766, %v782, %v634
  %v799 = vsel %vm767, %v783, %v641
  %v800 = vsel %vm768, %v784, %v648
  %v801 = vsel %vm769, %v785, %v655
  %v802 = vsel %vm770, %v786, %v662
  %v803 = vsel %vm771, %v787, %v669
  %v804 = vsel %vm772, %v788, %v676
  %v805 = vsel %vm773, %v789, %v683
  %v806 = vsel %vm774, %v790, %v690
  %v807 = vsel %vm775, %v791, %v697
  %v808 = vsel %vm776, %v792, %v704
  %v809 = vsel %vm777, %v793, %v711
  %v810 = vsel %vm778, %v794, %v718
  %v811 = vsel %vm779, %v795, %v725
  %v812 = vsel %vm780, %v796, %v732
  %vm813 = vcmp.lt.s32.totalorder %v620, 0
  %v814 = vsub.s32 0, %v620
  %v815 = vsel %vm813, %v814, %v620
  %v816 = vshrl.u32 %v815, 3
  %v817 = vand.u32 %v815, 7
  %v818 = vsub.s32 0, %v817
  %v819 = vsel %vm813, %v818, %v817
  %vm820 = vcmp.ne.s32.totalorder %v819, 0
  %vm821 = vcmp.lt.s32.totalorder %v819, 0
  %vm822 = vmand %vm821, %vm820
  %v823 = vadd.s32 %v819, 8
  %v824 = vsel %vm822, %v823, %v819
  %vm825 = vcmp.eq.s32.totalorder %v797, %v824
  %vm826 = vcmp.eq.s32.totalorder %v798, %v824
  %vm827 = vcmp.eq.s32.totalorder %v799, %v824
  %vm828 = vcmp.eq.s32.totalorder %v800, %v824
  %vm829 = vcmp.eq.s32.totalorder %v801, %v824
  %vm830 = vcmp.eq.s32.totalorder %v802, %v824
  %vm831 = vcmp.eq.s32.totalorder %v803, %v824
  %vm832 = vcmp.eq.s32.totalorder %v804, %v824
  %vm833 = vcmp.eq.s32.totalorder %v805, %v824
  %vm834 = vcmp.eq.s32.totalorder %v806, %v824
  %vm835 = vcmp.eq.s32.totalorder %v807, %v824
  %vm836 = vcmp.eq.s32.totalorder %v808, %v824
  %vm837 = vcmp.eq.s32.totalorder %v809, %v824
  %vm838 = vcmp.eq.s32.totalorder %v810, %v824
  %vm839 = vcmp.eq.s32.totalorder %v811, %v824
  %vm840 = vcmp.eq.s32.totalorder %v812, %v824
  %v841 = vsel %vm825, 1, 0
  %v842 = vsel %vm826, 1, 0
  %v843 = vsel %vm827, 1, 0
  %v844 = vsel %vm828, 1, 0
  %v845 = vsel %vm829, 1, 0
  %v846 = vsel %vm830, 1, 0
  %v847 = vsel %vm831, 1, 0
  %v848 = vsel %vm832, 1, 0
  %v849 = vsel %vm833, 1, 0
  %v850 = vsel %vm834, 1, 0
  %v851 = vsel %vm835, 1, 0
  %v852 = vsel %vm836, 1, 0
  %v853 = vsel %vm837, 1, 0
  %v854 = vsel %vm838, 1, 0
  %v855 = vsel %vm839, 1, 0
  %v856 = vsel %vm840, 1, 0
  %v857 = vcvt.s32.f32 %v841
  %v858 = vcvt.s32.f32 %v842
  %v859 = vcvt.s32.f32 %v843
  %v860 = vcvt.s32.f32 %v844
  %v861 = vcvt.s32.f32 %v845
  %v862 = vcvt.s32.f32 %v846
  %v863 = vcvt.s32.f32 %v847
  %v864 = vcvt.s32.f32 %v848
  %v865 = vcvt.s32.f32 %v849
  %v866 = vcvt.s32.f32 %v850
  %v867 = vcvt.s32.f32 %v851
  %v868 = vcvt.s32.f32 %v852
  %v869 = vcvt.s32.f32 %v853
  %v870 = vcvt.s32.f32 %v854
  %v871 = vcvt.s32.f32 %v855
  %v872 = vcvt.s32.f32 %v856
  %873 = vmatprep.subr.mxu0 0.0
  %874 = vmatpush1.msra.mxu0 %v857
  %875 = vmatprep.subr.mxu0 0.0
  %876 = vmatpush1.msra.mxu0 %v858
  %877 = vmatprep.subr.mxu0 0.0
  %878 = vmatpush1.msra.mxu0 %v859
  %879 = vmatprep.subr.mxu0 0.0
  %880 = vmatpush1.msra.mxu0 %v860
  %881 = vmatprep.subr.mxu0 0.0
  %882 = vmatpush1.msra.mxu0 %v861
  %883 = vmatprep.subr.mxu0 0.0
  %884 = vmatpush1.msra.mxu0 %v862
  %885 = vmatprep.subr.mxu0 0.0
  %886 = vmatpush1.msra.mxu0 %v863
  %887 = vmatprep.subr.mxu0 0.0
  %888 = vmatpush1.msra.mxu0 %v864
  %889 = vmatprep.subr.mxu0 0.0
  %890 = vmatpush1.msra.mxu0 %v865
  %891 = vmatprep.subr.mxu0 0.0
  %892 = vmatpush1.msra.mxu0 %v866
  %893 = vmatprep.subr.mxu0 0.0
  %894 = vmatpush1.msra.mxu0 %v867
  %895 = vmatprep.subr.mxu0 0.0
  %896 = vmatpush1.msra.mxu0 %v868
  %897 = vmatprep.subr.mxu0 0.0
  %898 = vmatpush1.msra.mxu0 %v869
  %899 = vmatprep.subr.mxu0 0.0
  %900 = vmatpush1.msra.mxu0 %v870
  %901 = vmatprep.subr.mxu0 0.0
  %902 = vmatpush1.msra.mxu0 %v871
  %903 = vmatprep.subr.mxu0 0.0
  %904 = vmatpush1.msra.mxu0 %v872
  %905 = vmatprep.subr.mxu0 0.0
  %906 = vmatpush1.msra.mxu0 0.0
  %907 = vmatprep.subr.mxu0 0.0
  %908 = vmatpush1.msra.mxu0 0.0
  %909 = vmatprep.subr.mxu0 0.0
  %910 = vmatpush1.msra.mxu0 0.0
  %911 = vmatprep.subr.mxu0 0.0
  %912 = vmatpush1.msra.mxu0 0.0
  %913 = vmatprep.subr.mxu0 0.0
  %914 = vmatpush1.msra.mxu0 0.0
  %915 = vmatprep.subr.mxu0 0.0
  %916 = vmatpush1.msra.mxu0 0.0
  %917 = vmatprep.subr.mxu0 0.0
  %918 = vmatpush1.msra.mxu0 0.0
  %919 = vmatprep.subr.mxu0 0.0
  %920 = vmatpush1.msra.mxu0 0.0
  %921 = vmatprep.subr.mxu0 0.0
  %922 = vmatpush1.msra.mxu0 0.0
  %923 = vmatprep.subr.mxu0 0.0
  %924 = vmatpush1.msra.mxu0 0.0
  %925 = vmatprep.subr.mxu0 0.0
  %926 = vmatpush1.msra.mxu0 0.0
  %927 = vmatprep.subr.mxu0 0.0
  %928 = vmatpush1.msra.mxu0 0.0
  %929 = vmatprep.subr.mxu0 0.0
  %930 = vmatpush1.msra.mxu0 0.0
  %931 = vmatprep.subr.mxu0 0.0
  %932 = vmatpush1.msra.mxu0 0.0
  %933 = vmatprep.subr.mxu0 0.0
  %934 = vmatpush1.msra.mxu0 0.0
  %935 = vmatprep.subr.mxu0 0.0
  %936 = vmatpush1.msra.mxu0 0.0
  %937 = vmatprep.mubr.f32.mxu0 0.0
  %938 = vmatmul.mubr.f32.gmra.mrb[0].mxu0 %v337
  %v939 = vpop.f32.mrb[0].mxu0
  %v940 = vadd.f32 0.0, %v939
  %v941 = vpop.f32.mrb[0].mxu0
  %942 = vmatprep.mubr.f32.mxu0 0.0
  %943 = vmatmul.mubr.f32.gmra.mrb[0].mxu0 %v338
  %v944 = vpop.f32.mrb[0].mxu0
  %v945 = vadd.f32 0.0, %v944
  %v946 = vpop.f32.mrb[0].mxu0
  %947 = vdwg.mxu0
  %v948 = vadd.f32 %v940, %v945
  %v949 = vrot.slane %v948, 4
  %v950 = vadd.f32 %v948, %v949
  %v951 = vrot.slane %v950, 2
  %v952 = vadd.f32 %v950, %v951
  %v953 = vrot.slane %v952, 1
  %v954 = vadd.f32 %v952, %v953
  %v955 = vadd.f32 %v954, 0.0
  %v956 = vmul.f32 %v337, %v337
  %v957 = vmul.f32 %v338, %v338
  %958 = vmatprep.subr.mxu0 0.0
  %959 = vmatpush1.msra.mxu0 %v857
  %960 = vmatprep.subr.mxu0 0.0
  %961 = vmatpush1.msra.mxu0 %v858
  %962 = vmatprep.subr.mxu0 0.0
  %963 = vmatpush1.msra.mxu0 %v859
  %964 = vmatprep.subr.mxu0 0.0
  %965 = vmatpush1.msra.mxu0 %v860
  %966 = vmatprep.subr.mxu0 0.0
  %967 = vmatpush1.msra.mxu0 %v861
  %968 = vmatprep.subr.mxu0 0.0
  %969 = vmatpush1.msra.mxu0 %v862
  %970 = vmatprep.subr.mxu0 0.0
  %971 = vmatpush1.msra.mxu0 %v863
  %972 = vmatprep.subr.mxu0 0.0
  %973 = vmatpush1.msra.mxu0 %v864
  %974 = vmatprep.subr.mxu0 0.0
  %975 = vmatpush1.msra.mxu0 %v865
  %976 = vmatprep.subr.mxu0 0.0
  %977 = vmatpush1.msra.mxu0 %v866
  %978 = vmatprep.subr.mxu0 0.0
  %979 = vmatpush1.msra.mxu0 %v867
  %980 = vmatprep.subr.mxu0 0.0
  %981 = vmatpush1.msra.mxu0 %v868
  %982 = vmatprep.subr.mxu0 0.0
  %983 = vmatpush1.msra.mxu0 %v869
  %984 = vmatprep.subr.mxu0 0.0
  %985 = vmatpush1.msra.mxu0 %v870
  %986 = vmatprep.subr.mxu0 0.0
  %987 = vmatpush1.msra.mxu0 %v871
  %988 = vmatprep.subr.mxu0 0.0
  %989 = vmatpush1.msra.mxu0 %v872
  %990 = vmatprep.subr.mxu0 0.0
  %991 = vmatpush1.msra.mxu0 0.0
  %992 = vmatprep.subr.mxu0 0.0
  %993 = vmatpush1.msra.mxu0 0.0
  %994 = vmatprep.subr.mxu0 0.0
  %995 = vmatpush1.msra.mxu0 0.0
  %996 = vmatprep.subr.mxu0 0.0
  %997 = vmatpush1.msra.mxu0 0.0
  %998 = vmatprep.subr.mxu0 0.0
  %999 = vmatpush1.msra.mxu0 0.0
  %1000 = vmatprep.subr.mxu0 0.0
  %1001 = vmatpush1.msra.mxu0 0.0
  %1002 = vmatprep.subr.mxu0 0.0
  %1003 = vmatpush1.msra.mxu0 0.0
  %1004 = vmatprep.subr.mxu0 0.0
  %1005 = vmatpush1.msra.mxu0 0.0
  %1006 = vmatprep.subr.mxu0 0.0
  %1007 = vmatpush1.msra.mxu0 0.0
  %1008 = vmatprep.subr.mxu0 0.0
  %1009 = vmatpush1.msra.mxu0 0.0
  %1010 = vmatprep.subr.mxu0 0.0
  %1011 = vmatpush1.msra.mxu0 0.0
  %1012 = vmatprep.subr.mxu0 0.0
  %1013 = vmatpush1.msra.mxu0 0.0
  %1014 = vmatprep.subr.mxu0 0.0
  %1015 = vmatpush1.msra.mxu0 0.0
  %1016 = vmatprep.subr.mxu0 0.0
  %1017 = vmatpush1.msra.mxu0 0.0
  %1018 = vmatprep.subr.mxu0 0.0
  %1019 = vmatpush1.msra.mxu0 0.0
  %1020 = vmatprep.subr.mxu0 0.0
  %1021 = vmatpush1.msra.mxu0 0.0
  %1022 = vmatprep.mubr.f32.mxu0 0.0
  %1023 = vmatmul.mubr.f32.gmra.mrb[0].mxu0 %v956
  %v1024 = vpop.f32.mrb[0].mxu0
  %v1025 = vadd.f32 0.0, %v1024
  %v1026 = vpop.f32.mrb[0].mxu0
  %1027 = vmatprep.mubr.f32.mxu0 0.0
  %1028 = vmatmul.mubr.f32.gmra.mrb[0].mxu0 %v957
  %v1029 = vpop.f32.mrb[0].mxu0
  %v1030 = vadd.f32 0.0, %v1029
  %v1031 = vpop.f32.mrb[0].mxu0
  %1032 = vdwg.mxu0
  %v1033 = vadd.f32 %v1025, %v1030
  %v1034 = vrot.slane %v1033, 4
  %v1035 = vadd.f32 %v1033, %v1034
  %v1036 = vrot.slane %v1035, 2
  %v1037 = vadd.f32 %v1035, %v1036
  %v1038 = vrot.slane %v1037, 1
  %v1039 = vadd.f32 %v1037, %v1038
  %v1040 = vadd.f32 %v1039, 0.0
  %1041 = vmatprep.subr.mxu0 0.0
  %1042 = vmatpush1.msra.mxu0 %v857
  %1043 = vmatprep.subr.mxu0 0.0
  %1044 = vmatpush1.msra.mxu0 %v858
  %1045 = vmatprep.subr.mxu0 0.0
  %1046 = vmatpush1.msra.mxu0 %v859
  %1047 = vmatprep.subr.mxu0 0.0
  %1048 = vmatpush1.msra.mxu0 %v860
  %1049 = vmatprep.subr.mxu0 0.0
  %1050 = vmatpush1.msra.mxu0 %v861
  %1051 = vmatprep.subr.mxu0 0.0
  %1052 = vmatpush1.msra.mxu0 %v862
  %1053 = vmatprep.subr.mxu0 0.0
  %1054 = vmatpush1.msra.mxu0 %v863
  %1055 = vmatprep.subr.mxu0 0.0
  %1056 = vmatpush1.msra.mxu0 %v864
  %1057 = vmatprep.subr.mxu0 0.0
  %1058 = vmatpush1.msra.mxu0 %v865
  %1059 = vmatprep.subr.mxu0 0.0
  %1060 = vmatpush1.msra.mxu0 %v866
  %1061 = vmatprep.subr.mxu0 0.0
  %1062 = vmatpush1.msra.mxu0 %v867
  %1063 = vmatprep.subr.mxu0 0.0
  %1064 = vmatpush1.msra.mxu0 %v868
  %1065 = vmatprep.subr.mxu0 0.0
  %1066 = vmatpush1.msra.mxu0 %v869
  %1067 = vmatprep.subr.mxu0 0.0
  %1068 = vmatpush1.msra.mxu0 %v870
  %1069 = vmatprep.subr.mxu0 0.0
  %1070 = vmatpush1.msra.mxu0 %v871
  %1071 = vmatprep.subr.mxu0 0.0
  %1072 = vmatpush1.msra.mxu0 %v872
  %1073 = vmatprep.subr.mxu0 0.0
  %1074 = vmatpush1.msra.mxu0 0.0
  %1075 = vmatprep.subr.mxu0 0.0
  %1076 = vmatpush1.msra.mxu0 0.0
  %1077 = vmatprep.subr.mxu0 0.0
  %1078 = vmatpush1.msra.mxu0 0.0
  %1079 = vmatprep.subr.mxu0 0.0
  %1080 = vmatpush1.msra.mxu0 0.0
  %1081 = vmatprep.subr.mxu0 0.0
  %1082 = vmatpush1.msra.mxu0 0.0
  %1083 = vmatprep.subr.mxu0 0.0
  %1084 = vmatpush1.msra.mxu0 0.0
  %1085 = vmatprep.subr.mxu0 0.0
  %1086 = vmatpush1.msra.mxu0 0.0
  %1087 = vmatprep.subr.mxu0 0.0
  %1088 = vmatpush1.msra.mxu0 0.0
  %1089 = vmatprep.subr.mxu0 0.0
  %1090 = vmatpush1.msra.mxu0 0.0
  %1091 = vmatprep.subr.mxu0 0.0
  %1092 = vmatpush1.msra.mxu0 0.0
  %1093 = vmatprep.subr.mxu0 0.0
  %1094 = vmatpush1.msra.mxu0 0.0
  %1095 = vmatprep.subr.mxu0 0.0
  %1096 = vmatpush1.msra.mxu0 0.0
  %1097 = vmatprep.subr.mxu0 0.0
  %1098 = vmatpush1.msra.mxu0 0.0
  %1099 = vmatprep.subr.mxu0 0.0
  %1100 = vmatpush1.msra.mxu0 0.0
  %1101 = vmatprep.subr.mxu0 0.0
  %1102 = vmatpush1.msra.mxu0 0.0
  %1103 = vmatprep.subr.mxu0 0.0
  %1104 = vmatpush1.msra.mxu0 0.0
  %1105 = vmatprep.mubr.f32.mxu0 0.0
  %1106 = vmatmul.mubr.f32.gmra.mrb[0].mxu0 %v600
  %v1107 = vpop.f32.mrb[0].mxu0
  %v1108 = vadd.f32 0.0, %v1107
  %v1109 = vpop.f32.mrb[0].mxu0
  %1110 = vmatprep.mubr.f32.mxu0 0.0
  %1111 = vmatmul.mubr.f32.gmra.mrb[0].mxu0 %v601
  %v1112 = vpop.f32.mrb[0].mxu0
  %v1113 = vadd.f32 0.0, %v1112
  %v1114 = vpop.f32.mrb[0].mxu0
  %1115 = vdwg.mxu0
  %v1116 = vadd.f32 %v1108, %v1113
  %v1117 = vrot.slane %v1116, 4
  %v1118 = vadd.f32 %v1116, %v1117
  %v1119 = vrot.slane %v1118, 2
  %v1120 = vadd.f32 %v1118, %v1119
  %v1121 = vrot.slane %v1120, 1
  %v1122 = vadd.f32 %v1120, %v1121
  %v1123 = vadd.f32 %v955, %v1122
  %v1124 = vmul.f32 %v600, %v600
  %v1125 = vmul.f32 %v601, %v601
  %1126 = vmatprep.subr.mxu0 0.0
  %1127 = vmatpush1.msra.mxu0 %v857
  %1128 = vmatprep.subr.mxu0 0.0
  %1129 = vmatpush1.msra.mxu0 %v858
  %1130 = vmatprep.subr.mxu0 0.0
  %1131 = vmatpush1.msra.mxu0 %v859
  %1132 = vmatprep.subr.mxu0 0.0
  %1133 = vmatpush1.msra.mxu0 %v860
  %1134 = vmatprep.subr.mxu0 0.0
  %1135 = vmatpush1.msra.mxu0 %v861
  %1136 = vmatprep.subr.mxu0 0.0
  %1137 = vmatpush1.msra.mxu0 %v862
  %1138 = vmatprep.subr.mxu0 0.0
  %1139 = vmatpush1.msra.mxu0 %v863
  %1140 = vmatprep.subr.mxu0 0.0
  %1141 = vmatpush1.msra.mxu0 %v864
  %1142 = vmatprep.subr.mxu0 0.0
  %1143 = vmatpush1.msra.mxu0 %v865
  %1144 = vmatprep.subr.mxu0 0.0
  %1145 = vmatpush1.msra.mxu0 %v866
  %1146 = vmatprep.subr.mxu0 0.0
  %1147 = vmatpush1.msra.mxu0 %v867
  %1148 = vmatprep.subr.mxu0 0.0
  %1149 = vmatpush1.msra.mxu0 %v868
  %1150 = vmatprep.subr.mxu0 0.0
  %1151 = vmatpush1.msra.mxu0 %v869
  %1152 = vmatprep.subr.mxu0 0.0
  %1153 = vmatpush1.msra.mxu0 %v870
  %1154 = vmatprep.subr.mxu0 0.0
  %1155 = vmatpush1.msra.mxu0 %v871
  %1156 = vmatprep.subr.mxu0 0.0
  %1157 = vmatpush1.msra.mxu0 %v872
  %1158 = vmatprep.subr.mxu0 0.0
  %1159 = vmatpush1.msra.mxu0 0.0
  %1160 = vmatprep.subr.mxu0 0.0
  %1161 = vmatpush1.msra.mxu0 0.0
  %1162 = vmatprep.subr.mxu0 0.0
  %1163 = vmatpush1.msra.mxu0 0.0
  %1164 = vmatprep.subr.mxu0 0.0
  %1165 = vmatpush1.msra.mxu0 0.0
  %1166 = vmatprep.subr.mxu0 0.0
  %1167 = vmatpush1.msra.mxu0 0.0
  %1168 = vmatprep.subr.mxu0 0.0
  %1169 = vmatpush1.msra.mxu0 0.0
  %1170 = vmatprep.subr.mxu0 0.0
  %1171 = vmatpush1.msra.mxu0 0.0
  %1172 = vmatprep.subr.mxu0 0.0
  %1173 = vmatpush1.msra.mxu0 0.0
  %1174 = vmatprep.subr.mxu0 0.0
  %1175 = vmatpush1.msra.mxu0 0.0
  %1176 = vmatprep.subr.mxu0 0.0
  %1177 = vmatpush1.msra.mxu0 0.0
  %1178 = vmatprep.subr.mxu0 0.0
  %1179 = vmatpush1.msra.mxu0 0.0
  %1180 = vmatprep.subr.mxu0 0.0
  %1181 = vmatpush1.msra.mxu0 0.0
  %1182 = vmatprep.subr.mxu0 0.0
  %1183 = vmatpush1.msra.mxu0 0.0
  %1184 = vmatprep.subr.mxu0 0.0
  %1185 = vmatpush1.msra.mxu0 0.0
  %1186 = vmatprep.subr.mxu0 0.0
  %1187 = vmatpush1.msra.mxu0 0.0
  %1188 = vmatprep.subr.mxu0 0.0
  %1189 = vmatpush1.msra.mxu0 0.0
  %1190 = vmatprep.mubr.f32.mxu0 0.0
  %1191 = vmatmul.mubr.f32.gmra.mrb[0].mxu0 %v1124
  %v1192 = vpop.f32.mrb[0].mxu0
  %v1193 = vadd.f32 0.0, %v1192
  %v1194 = vpop.f32.mrb[0].mxu0
  %1195 = vmatprep.mubr.f32.mxu0 0.0
  %1196 = vmatmul.mubr.f32.gmra.mrb[0].mxu0 %v1125
  %v1197 = vpop.f32.mrb[0].mxu0
  %v1198 = vadd.f32 0.0, %v1197
  %v1199 = vpop.f32.mrb[0].mxu0
  %1200 = vdwg.mxu0
  %v1201 = vadd.f32 %v1193, %v1198
  %v1202 = vrot.slane %v1201, 4
  %v1203 = vadd.f32 %v1201, %v1202
  %v1204 = vrot.slane %v1203, 2
  %v1205 = vadd.f32 %v1203, %v1204
  %v1206 = vrot.slane %v1205, 1
  %v1207 = vadd.f32 %v1205, %v1206
  %v1208 = vadd.f32 %v1040, %v1207
  %v1209 = vmul.f32 %v1123, 0.001953125
  %v1210 = vmul.f32 %v1208, 0.001953125
  %v1211 = vmul.f32 %v1209, %v1209
  %v1212 = vsub.f32 %v1210, %v1211
  %v1213 = vmax.f32 %v1212, 0.0
  %v1214 = vld [vmem:[%s4] sm:$0x1]
  %v1215 = vadd.f32 %v1213, 1e-05
  %v1216 = vrsqrt.pop %v1215
  %v1217 = vmul.f32 %v1214, %v1216
  %v1218 = vld [vmem:[%s5] sm:$0x1]
  %v1219 = vmul.f32 %v1209, %v1217
  %v1220 = vsub.f32 %v1218, %v1219
  %1221 = vst [vmem:[#allocation3] sm:$0x1] 0.0
  %1222 = vst [vmem:[#allocation3 + $0x18] sm:$0x1] 0.0
  %1223 = vst [vmem:[#allocation3 + $0x11] sm:$0x1] 0.0
  %1224 = vst [vmem:[#allocation3 + $0x29] sm:$0x1] 0.0
  %v1226 = vlaneseq
  %v1227 = vshrl.u32 %v1226, 7
  %v1228 = vsub.s32 0, %v1227
  %v1229 = vrot.slane %v1217, %v1228
  %v1231 = vmul.f32 %v337, %v1229
  %v1232 = vmul.f32 %v338, %v1229
  %v1234 = vlaneseq
  %v1235 = vshrl.u32 %v1234, 7
  %v1236 = vsub.s32 0, %v1235
  %v1237 = vrot.slane %v1220, %v1236
  %v1239 = vadd.f32 %v1231, %v1237
  %v1240 = vadd.f32 %v1232, %v1237
  %v1241 = vmax.f32 %v1239, 0.0
  %v1242 = vmax.f32 %v1240, 0.0
  %1243 = vst [vmem:[#allocation3 + $0x1] sm:$0xff] %v1241
  %1244 = vst [vmem:[#allocation3 + $0x9] sm:$0xff] %v1242
  %v1245 = vmul.f32 %v600, %v1229
  %v1246 = vmul.f32 %v601, %v1229
  %v1247 = vadd.f32 %v1245, %v1237
  %v1248 = vadd.f32 %v1246, %v1237
  %v1249 = vmax.f32 %v1247, 0.0
  %v1250 = vmax.f32 %v1248, 0.0
  %s1251 = scalar_lea.vmem [#allocation3], 24
  %1252 = vst [vmem:[%s1251 + $0x1] sm:$0xff] %v1249
  %1253 = vst [vmem:[%s1251 + $0x9] sm:$0xff] %v1250
  %v1254 = vld [vmem:[#allocation3] sm:$0xff]
  %v1255 = vld [vmem:[#allocation3 + $0x8] sm:$0xff]
  %v1256 = vld [vmem:[#allocation3 + $0x10] sm:$0x3]
  %v1257 = vld [vmem:[%s6] sm:$0xff]
  %v1258 = vld [vmem:[%s6 + $0x8] sm:$0xff]
  %v1259 = vld [vmem:[%s6 + $0x10] sm:$0xff]
  %v1260 = vld [vmem:[%s6 + $0x18] sm:$0xff]
  %v1261 = vld [vmem:[%s6 + $0x20] sm:$0xff]
  %v1262 = vld [vmem:[%s6 + $0x28] sm:$0xff]
  %v1263 = vld [vmem:[%s6 + $0x30] sm:$0xff]
  %v1264 = vld [vmem:[%s6 + $0x38] sm:$0xff]
  %v1265 = vld [vmem:[%s6 + $0x40] sm:$0xff]
  %v1266 = vld [vmem:[%s6 + $0x48] sm:$0xff]
  %v1267 = vld [vmem:[%s6 + $0x50] sm:$0xff]
  %v1268 = vld [vmem:[%s6 + $0x58] sm:$0xff]
  %v1269 = vld [vmem:[%s6 + $0x60] sm:$0xff]
  %v1270 = vld [vmem:[%s6 + $0x68] sm:$0xff]
  %v1271 = vld [vmem:[%s6 + $0x70] sm:$0xff]
  %v1272 = vld [vmem:[%s6 + $0x78] sm:$0xff]
  %s1273 = scalar_lea.vmem %s6, 128
  %v1274 = vld [vmem:[%s1273] sm:$0xff]
  %v1275 = vld [vmem:[%s1273 + $0x8] sm:$0xff]
  %v1276 = vld [vmem:[%s1273 + $0x10] sm:$0xff]
  %v1277 = vld [vmem:[%s1273 + $0x18] sm:$0xff]
  %v1278 = vld [vmem:[%s1273 + $0x20] sm:$0xff]
  %v1279 = vld [vmem:[%s1273 + $0x28] sm:$0xff]
  %v1280 = vld [vmem:[%s1273 + $0x30] sm:$0xff]
  %v1281 = vld [vmem:[%s1273 + $0x38] sm:$0xff]
  %v1282 = vld [vmem:[%s1273 + $0x40] sm:$0xff]
  %v1283 = vld [vmem:[%s1273 + $0x48] sm:$0xff]
  %v1284 = vld [vmem:[%s1273 + $0x50] sm:$0xff]
  %v1285 = vld [vmem:[%s1273 + $0x58] sm:$0xff]
  %v1286 = vld [vmem:[%s1273 + $0x60] sm:$0xff]
  %v1287 = vld [vmem:[%s1273 + $0x68] sm:$0xff]
  %v1288 = vld [vmem:[%s1273 + $0x70] sm:$0xff]
  %v1289 = vld [vmem:[%s1273 + $0x78] sm:$0xff]
  %v1293 = vrot.slane %v1254, 1
  %v1294 = vrot.slane %v1255, 1
  %v1295 = vsel %vm66, %v1293, %v1294
  %v1296 = vrot.slane %v1256, 1
  %v1297 = vsel %vm66, %v1294, %v1296
  %1300 = vmatprep.subr.mxu0 0.0
  %1301 = vmatpush1.msra.mxu0 %v1274
  %1302 = vmatprep.subr.mxu0 0.0
  %1303 = vmatpush1.msra.mxu0 %v1275
  %1304 = vmatprep.subr.mxu0 0.0
  %1305 = vmatpush1.msra.mxu0 %v1276
  %1306 = vmatprep.subr.mxu0 0.0
  %1307 = vmatpush1.msra.mxu0 %v1277
  %1308 = vmatprep.subr.mxu0 0.0
  %1309 = vmatpush1.msra.mxu0 %v1278
  %1310 = vmatprep.subr.mxu0 0.0
  %1311 = vmatpush1.msra.mxu0 %v1279
  %1312 = vmatprep.subr.mxu0 0.0
  %1313 = vmatpush1.msra.mxu0 %v1280
  %1314 = vmatprep.subr.mxu0 0.0
  %1315 = vmatpush1.msra.mxu0 %v1281
  %1316 = vmatprep.subr.mxu0 0.0
  %1317 = vmatpush1.msra.mxu0 %v1282
  %1318 = vmatprep.subr.mxu0 0.0
  %1319 = vmatpush1.msra.mxu0 %v1283
  %1320 = vmatprep.subr.mxu0 0.0
  %1321 = vmatpush1.msra.mxu0 %v1284
  %1322 = vmatprep.subr.mxu0 0.0
  %1323 = vmatpush1.msra.mxu0 %v1285
  %1324 = vmatprep.subr.mxu0 0.0
  %1325 = vmatpush1.msra.mxu0 %v1286
  %1326 = vmatprep.subr.mxu0 0.0
  %1327 = vmatpush1.msra.mxu0 %v1287
  %1328 = vmatprep.subr.mxu0 0.0
  %1329 = vmatpush1.msra.mxu0 %v1288
  %1330 = vmatprep.subr.mxu0 0.0
  %1331 = vmatpush1.msra.mxu0 %v1289
  %1332 = vmatprep.subr.mxu0 0.0
  %1333 = vmatpush1.msra.mxu0 0.0
  %1334 = vmatprep.subr.mxu0 0.0
  %1335 = vmatpush1.msra.mxu0 0.0
  %1336 = vmatprep.subr.mxu0 0.0
  %1337 = vmatpush1.msra.mxu0 0.0
  %1338 = vmatprep.subr.mxu0 0.0
  %1339 = vmatpush1.msra.mxu0 0.0
  %1340 = vmatprep.subr.mxu0 0.0
  %1341 = vmatpush1.msra.mxu0 0.0
  %1342 = vmatprep.subr.mxu0 0.0
  %1343 = vmatpush1.msra.mxu0 0.0
  %1344 = vmatprep.subr.mxu0 0.0
  %1345 = vmatpush1.msra.mxu0 0.0
  %1346 = vmatprep.subr.mxu0 0.0
  %1347 = vmatpush1.msra.mxu0 0.0
  %1348 = vmatprep.subr.mxu0 0.0
  %1349 = vmatpush1.msra.mxu0 0.0
  %1350 = vmatprep.subr.mxu0 0.0
  %1351 = vmatpush1.msra.mxu0 0.0
  %1352 = vmatprep.subr.mxu0 0.0
  %1353 = vmatpush1.msra.mxu0 0.0
  %1354 = vmatprep.subr.mxu0 0.0
  %1355 = vmatpush1.msra.mxu0 0.0
  %1356 = vmatprep.subr.mxu0 0.0
  %1357 = vmatpush1.msra.mxu0 0.0
  %1358 = vmatprep.subr.mxu0 0.0
  %1359 = vmatpush1.msra.mxu0 0.0
  %1360 = vmatprep.subr.mxu0 0.0
  %1361 = vmatpush1.msra.mxu0 0.0
  %1362 = vmatprep.subr.mxu0 0.0
  %1363 = vmatpush1.msra.mxu0 0.0
  %1364 = vmatprep.mubr.f32.mxu0 0.0
  %1365 = vmatmul.mubr.f32.gmra.mrb[0].mxu0 %v1295
  %v1366 = vpop.f32.mrb[0].mxu0
  %v1367 = vadd.f32 0.0, %v1366
  %v1368 = vpop.f32.mrb[0].mxu0
  %1369 = vmatprep.mubr.f32.mxu0 0.0
  %1370 = vmatmul.mubr.f32.gmra.mrb[0].mxu0 %v1297
  %v1371 = vpop.f32.mrb[0].mxu0
  %v1372 = vadd.f32 0.0, %v1371
  %v1373 = vpop.f32.mrb[0].mxu0
  %1374 = vdwg.mxu0
  %1375 = vmatprep.subr.mxu0 0.0
  %1376 = vmatpush1.msra.mxu0 %v1257
  %1377 = vmatprep.subr.mxu0 0.0
  %1378 = vmatpush1.msra.mxu0 %v1258
  %1379 = vmatprep.subr.mxu0 0.0
  %1380 = vmatpush1.msra.mxu0 %v1259
  %1381 = vmatprep.subr.mxu0 0.0
  %1382 = vmatpush1.msra.mxu0 %v1260
  %1383 = vmatprep.subr.mxu0 0.0
  %1384 = vmatpush1.msra.mxu0 %v1261
  %1385 = vmatprep.subr.mxu0 0.0
  %1386 = vmatpush1.msra.mxu0 %v1262
  %1387 = vmatprep.subr.mxu0 0.0
  %1388 = vmatpush1.msra.mxu0 %v1263
  %1389 = vmatprep.subr.mxu0 0.0
  %1390 = vmatpush1.msra.mxu0 %v1264
  %1391 = vmatprep.subr.mxu0 0.0
  %1392 = vmatpush1.msra.mxu0 %v1265
  %1393 = vmatprep.subr.mxu0 0.0
  %1394 = vmatpush1.msra.mxu0 %v1266
  %1395 = vmatprep.subr.mxu0 0.0
  %1396 = vmatpush1.msra.mxu0 %v1267
  %1397 = vmatprep.subr.mxu0 0.0
  %1398 = vmatpush1.msra.mxu0 %v1268
  %1399 = vmatprep.subr.mxu0 0.0
  %1400 = vmatpush1.msra.mxu0 %v1269
  %1401 = vmatprep.subr.mxu0 0.0
  %1402 = vmatpush1.msra.mxu0 %v1270
  %1403 = vmatprep.subr.mxu0 0.0
  %1404 = vmatpush1.msra.mxu0 %v1271
  %1405 = vmatprep.subr.mxu0 0.0
  %1406 = vmatpush1.msra.mxu0 %v1272
  %1407 = vmatprep.subr.mxu0 0.0
  %1408 = vmatpush1.msra.mxu0 0.0
  %1409 = vmatprep.subr.mxu0 0.0
  %1410 = vmatpush1.msra.mxu0 0.0
  %1411 = vmatprep.subr.mxu0 0.0
  %1412 = vmatpush1.msra.mxu0 0.0
  %1413 = vmatprep.subr.mxu0 0.0
  %1414 = vmatpush1.msra.mxu0 0.0
  %1415 = vmatprep.subr.mxu0 0.0
  %1416 = vmatpush1.msra.mxu0 0.0
  %1417 = vmatprep.subr.mxu0 0.0
  %1418 = vmatpush1.msra.mxu0 0.0
  %1419 = vmatprep.subr.mxu0 0.0
  %1420 = vmatpush1.msra.mxu0 0.0
  %1421 = vmatprep.subr.mxu0 0.0
  %1422 = vmatpush1.msra.mxu0 0.0
  %1423 = vmatprep.subr.mxu0 0.0
  %1424 = vmatpush1.msra.mxu0 0.0
  %1425 = vmatprep.subr.mxu0 0.0
  %1426 = vmatpush1.msra.mxu0 0.0
  %1427 = vmatprep.subr.mxu0 0.0
  %1428 = vmatpush1.msra.mxu0 0.0
  %1429 = vmatprep.subr.mxu0 0.0
  %1430 = vmatpush1.msra.mxu0 0.0
  %1431 = vmatprep.subr.mxu0 0.0
  %1432 = vmatpush1.msra.mxu0 0.0
  %1433 = vmatprep.subr.mxu0 0.0
  %1434 = vmatpush1.msra.mxu0 0.0
  %1435 = vmatprep.subr.mxu0 0.0
  %1436 = vmatpush1.msra.mxu0 0.0
  %1437 = vmatprep.subr.mxu0 0.0
  %1438 = vmatpush1.msra.mxu0 0.0
  %1439 = vmatprep.mubr.f32.mxu0 0.0
  %1440 = vmatmul.mubr.f32.gmra.mrb[0].mxu0 %v1254
  %v1441 = vpop.f32.mrb[0].mxu0
  %v1442 = vadd.f32 %v1367, %v1441
  %v1443 = vpop.f32.mrb[0].mxu0
  %1444 = vmatprep.mubr.f32.mxu0 0.0
  %1445 = vmatmul.mubr.f32.gmra.mrb[0].mxu0 %v1255
  %v1446 = vpop.f32.mrb[0].mxu0
  %v1447 = vadd.f32 %v1372, %v1446
  %v1448 = vpop.f32.mrb[0].mxu0
  %1449 = vdwg.mxu0
  %s1450 = scalar_lea.vmem %s6, 256
  %v1451 = vld [vmem:[%s1450] sm:$0xff]
  %v1452 = vld [vmem:[%s1450 + $0x8] sm:$0xff]
  %v1453 = vld [vmem:[%s1450 + $0x10] sm:$0xff]
  %v1454 = vld [vmem:[%s1450 + $0x18] sm:$0xff]
  %v1455 = vld [vmem:[%s1450 + $0x20] sm:$0xff]
  %v1456 = vld [vmem:[%s1450 + $0x28] sm:$0xff]
  %v1457 = vld [vmem:[%s1450 + $0x30] sm:$0xff]
  %v1458 = vld [vmem:[%s1450 + $0x38] sm:$0xff]
  %v1459 = vld [vmem:[%s1450 + $0x40] sm:$0xff]
  %v1460 = vld [vmem:[%s1450 + $0x48] sm:$0xff]
  %v1461 = vld [vmem:[%s1450 + $0x50] sm:$0xff]
  %v1462 = vld [vmem:[%s1450 + $0x58] sm:$0xff]
  %v1463 = vld [vmem:[%s1450 + $0x60] sm:$0xff]
  %v1464 = vld [vmem:[%s1450 + $0x68] sm:$0xff]
  %v1465 = vld [vmem:[%s1450 + $0x70] sm:$0xff]
  %v1466 = vld [vmem:[%s1450 + $0x78] sm:$0xff]
  %v1467 = vrot.slane %v1254, 2
  %v1468 = vrot.slane %v1255, 2
  %v1469 = vsel %vm239, %v1467, %v1468
  %v1470 = vrot.slane %v1256, 2
  %v1471 = vsel %vm239, %v1468, %v1470
  %1474 = vmatprep.subr.mxu0 0.0
  %1475 = vmatpush1.msra.mxu0 %v1451
  %1476 = vmatprep.subr.mxu0 0.0
  %1477 = vmatpush1.msra.mxu0 %v1452
  %1478 = vmatprep.subr.mxu0 0.0
  %1479 = vmatpush1.msra.mxu0 %v1453
  %1480 = vmatprep.subr.mxu0 0.0
  %1481 = vmatpush1.msra.mxu0 %v1454
  %1482 = vmatprep.subr.mxu0 0.0
  %1483 = vmatpush1.msra.mxu0 %v1455
  %1484 = vmatprep.subr.mxu0 0.0
  %1485 = vmatpush1.msra.mxu0 %v1456
  %1486 = vmatprep.subr.mxu0 0.0
  %1487 = vmatpush1.msra.mxu0 %v1457
  %1488 = vmatprep.subr.mxu0 0.0
  %1489 = vmatpush1.msra.mxu0 %v1458
  %1490 = vmatprep.subr.mxu0 0.0
  %1491 = vmatpush1.msra.mxu0 %v1459
  %1492 = vmatprep.subr.mxu0 0.0
  %1493 = vmatpush1.msra.mxu0 %v1460
  %1494 = vmatprep.subr.mxu0 0.0
  %1495 = vmatpush1.msra.mxu0 %v1461
  %1496 = vmatprep.subr.mxu0 0.0
  %1497 = vmatpush1.msra.mxu0 %v1462
  %1498 = vmatprep.subr.mxu0 0.0
  %1499 = vmatpush1.msra.mxu0 %v1463
  %1500 = vmatprep.subr.mxu0 0.0
  %1501 = vmatpush1.msra.mxu0 %v1464
  %1502 = vmatprep.subr.mxu0 0.0
  %1503 = vmatpush1.msra.mxu0 %v1465
  %1504 = vmatprep.subr.mxu0 0.0
  %1505 = vmatpush1.msra.mxu0 %v1466
  %1506 = vmatprep.subr.mxu0 0.0
  %1507 = vmatpush1.msra.mxu0 0.0
  %1508 = vmatprep.subr.mxu0 0.0
  %1509 = vmatpush1.msra.mxu0 0.0
  %1510 = vmatprep.subr.mxu0 0.0
  %1511 = vmatpush1.msra.mxu0 0.0
  %1512 = vmatprep.subr.mxu0 0.0
  %1513 = vmatpush1.msra.mxu0 0.0
  %1514 = vmatprep.subr.mxu0 0.0
  %1515 = vmatpush1.msra.mxu0 0.0
  %1516 = vmatprep.subr.mxu0 0.0
  %1517 = vmatpush1.msra.mxu0 0.0
  %1518 = vmatprep.subr.mxu0 0.0
  %1519 = vmatpush1.msra.mxu0 0.0
  %1520 = vmatprep.subr.mxu0 0.0
  %1521 = vmatpush1.msra.mxu0 0.0
  %1522 = vmatprep.subr.mxu0 0.0
  %1523 = vmatpush1.msra.mxu0 0.0
  %1524 = vmatprep.subr.mxu0 0.0
  %1525 = vmatpush1.msra.mxu0 0.0
  %1526 = vmatprep.subr.mxu0 0.0
  %1527 = vmatpush1.msra.mxu0 0.0
  %1528 = vmatprep.subr.mxu0 0.0
  %1529 = vmatpush1.msra.mxu0 0.0
  %1530 = vmatprep.subr.mxu0 0.0
  %1531 = vmatpush1.msra.mxu0 0.0
  %1532 = vmatprep.subr.mxu0 0.0
  %1533 = vmatpush1.msra.mxu0 0.0
  %1534 = vmatprep.subr.mxu0 0.0
  %1535 = vmatpush1.msra.mxu0 0.0
  %1536 = vmatprep.subr.mxu0 0.0
  %1537 = vmatpush1.msra.mxu0 0.0
  %1538 = vmatprep.mubr.f32.mxu0 0.0
  %1539 = vmatmul.mubr.f32.gmra.mrb[0].mxu0 %v1469
  %v1540 = vpop.f32.mrb[0].mxu0
  %v1541 = vadd.f32 0.0, %v1540
  %v1542 = vpop.f32.mrb[0].mxu0
  %1543 = vmatprep.mubr.f32.mxu0 0.0
  %1544 = vmatmul.mubr.f32.gmra.mrb[0].mxu0 %v1471
  %v1545 = vpop.f32.mrb[0].mxu0
  %v1546 = vadd.f32 0.0, %v1545
  %v1547 = vpop.f32.mrb[0].mxu0
  %1548 = vdwg.mxu0
  %v1549 = vadd.f32 %v1442, %v1541
  %v1550 = vadd.f32 %v1447, %v1546
  %v1551 = vld [vmem:[%s7] sm:$0x1]
  %v1553 = vlaneseq
  %v1554 = vshrl.u32 %v1553, 7
  %v1555 = vsub.s32 0, %v1554
  %v1556 = vrot.slane %v1551, %v1555
  %v1558 = vadd.f32 %v1549, %v1556
  %v1559 = vadd.f32 %v1550, %v1556
  %1560 = vst [vmem:[%s8] sm:$0xff] %v1558
  %1561 = vst [vmem:[%s8 + $0x8] sm:$0xff] %v1559
  %v1562 = vld [vmem:[%s1251] sm:$0xff]
  %v1563 = vld [vmem:[%s1251 + $0x8] sm:$0xff]
  %v1564 = vld [vmem:[%s1251 + $0x10] sm:$0x3]
  %v1565 = vld [vmem:[%s6] sm:$0xff]
  %v1566 = vld [vmem:[%s6 + $0x8] sm:$0xff]
  %v1567 = vld [vmem:[%s6 + $0x10] sm:$0xff]
  %v1568 = vld [vmem:[%s6 + $0x18] sm:$0xff]
  %v1569 = vld [vmem:[%s6 + $0x20] sm:$0xff]
  %v1570 = vld [vmem:[%s6 + $0x28] sm:$0xff]
  %v1571 = vld [vmem:[%s6 + $0x30] sm:$0xff]
  %v1572 = vld [vmem:[%s6 + $0x38] sm:$0xff]
  %v1573 = vld [vmem:[%s6 + $0x40] sm:$0xff]
  %v1574 = vld [vmem:[%s6 + $0x48] sm:$0xff]
  %v1575 = vld [vmem:[%s6 + $0x50] sm:$0xff]
  %v1576 = vld [vmem:[%s6 + $0x58] sm:$0xff]
  %v1577 = vld [vmem:[%s6 + $0x60] sm:$0xff]
  %v1578 = vld [vmem:[%s6 + $0x68] sm:$0xff]
  %v1579 = vld [vmem:[%s6 + $0x70] sm:$0xff]
  %v1580 = vld [vmem:[%s6 + $0x78] sm:$0xff]
  %v1581 = vld [vmem:[%s1273] sm:$0xff]
  %v1582 = vld [vmem:[%s1273 + $0x8] sm:$0xff]
  %v1583 = vld [vmem:[%s1273 + $0x10] sm:$0xff]
  %v1584 = vld [vmem:[%s1273 + $0x18] sm:$0xff]
  %v1585 = vld [vmem:[%s1273 + $0x20] sm:$0xff]
  %v1586 = vld [vmem:[%s1273 + $0x28] sm:$0xff]
  %v1587 = vld [vmem:[%s1273 + $0x30] sm:$0xff]
  %v1588 = vld [vmem:[%s1273 + $0x38] sm:$0xff]
  %v1589 = vld [vmem:[%s1273 + $0x40] sm:$0xff]
  %v1590 = vld [vmem:[%s1273 + $0x48] sm:$0xff]
  %v1591 = vld [vmem:[%s1273 + $0x50] sm:$0xff]
  %v1592 = vld [vmem:[%s1273 + $0x58] sm:$0xff]
  %v1593 = vld [vmem:[%s1273 + $0x60] sm:$0xff]
  %v1594 = vld [vmem:[%s1273 + $0x68] sm:$0xff]
  %v1595 = vld [vmem:[%s1273 + $0x70] sm:$0xff]
  %v1596 = vld [vmem:[%s1273 + $0x78] sm:$0xff]
  %v1600 = vrot.slane %v1562, 1
  %v1601 = vrot.slane %v1563, 1
  %v1602 = vsel %vm66, %v1600, %v1601
  %v1603 = vrot.slane %v1564, 1
  %v1604 = vsel %vm66, %v1601, %v1603
  %1607 = vmatprep.subr.mxu0 0.0
  %1608 = vmatpush1.msra.mxu0 %v1581
  %1609 = vmatprep.subr.mxu0 0.0
  %1610 = vmatpush1.msra.mxu0 %v1582
  %1611 = vmatprep.subr.mxu0 0.0
  %1612 = vmatpush1.msra.mxu0 %v1583
  %1613 = vmatprep.subr.mxu0 0.0
  %1614 = vmatpush1.msra.mxu0 %v1584
  %1615 = vmatprep.subr.mxu0 0.0
  %1616 = vmatpush1.msra.mxu0 %v1585
  %1617 = vmatprep.subr.mxu0 0.0
  %1618 = vmatpush1.msra.mxu0 %v1586
  %1619 = vmatprep.subr.mxu0 0.0
  %1620 = vmatpush1.msra.mxu0 %v1587
  %1621 = vmatprep.subr.mxu0 0.0
  %1622 = vmatpush1.msra.mxu0 %v1588
  %1623 = vmatprep.subr.mxu0 0.0
  %1624 = vmatpush1.msra.mxu0 %v1589
  %1625 = vmatprep.subr.mxu0 0.0
  %1626 = vmatpush1.msra.mxu0 %v1590
  %1627 = vmatprep.subr.mxu0 0.0
  %1628 = vmatpush1.msra.mxu0 %v1591
  %1629 = vmatprep.subr.mxu0 0.0
  %1630 = vmatpush1.msra.mxu0 %v1592
  %1631 = vmatprep.subr.mxu0 0.0
  %1632 = vmatpush1.msra.mxu0 %v1593
  %1633 = vmatprep.subr.mxu0 0.0
  %1634 = vmatpush1.msra.mxu0 %v1594
  %1635 = vmatprep.subr.mxu0 0.0
  %1636 = vmatpush1.msra.mxu0 %v1595
  %1637 = vmatprep.subr.mxu0 0.0
  %1638 = vmatpush1.msra.mxu0 %v1596
  %1639 = vmatprep.subr.mxu0 0.0
  %1640 = vmatpush1.msra.mxu0 0.0
  %1641 = vmatprep.subr.mxu0 0.0
  %1642 = vmatpush1.msra.mxu0 0.0
  %1643 = vmatprep.subr.mxu0 0.0
  %1644 = vmatpush1.msra.mxu0 0.0
  %1645 = vmatprep.subr.mxu0 0.0
  %1646 = vmatpush1.msra.mxu0 0.0
  %1647 = vmatprep.subr.mxu0 0.0
  %1648 = vmatpush1.msra.mxu0 0.0
  %1649 = vmatprep.subr.mxu0 0.0
  %1650 = vmatpush1.msra.mxu0 0.0
  %1651 = vmatprep.subr.mxu0 0.0
  %1652 = vmatpush1.msra.mxu0 0.0
  %1653 = vmatprep.subr.mxu0 0.0
  %1654 = vmatpush1.msra.mxu0 0.0
  %1655 = vmatprep.subr.mxu0 0.0
  %1656 = vmatpush1.msra.mxu0 0.0
  %1657 = vmatprep.subr.mxu0 0.0
  %1658 = vmatpush1.msra.mxu0 0.0
  %1659 = vmatprep.subr.mxu0 0.0
  %1660 = vmatpush1.msra.mxu0 0.0
  %1661 = vmatprep.subr.mxu0 0.0
  %1662 = vmatpush1.msra.mxu0 0.0
  %1663 = vmatprep.subr.mxu0 0.0
  %1664 = vmatpush1.msra.mxu0 0.0
  %1665 = vmatprep.subr.mxu0 0.0
  %1666 = vmatpush1.msra.mxu0 0.0
  %1667 = vmatprep.subr.mxu0 0.0
  %1668 = vmatpush1.msra.mxu0 0.0
  %1669 = vmatprep.subr.mxu0 0.0
  %1670 = vmatpush1.msra.mxu0 0.0
  %1671 = vmatprep.mubr.f32.mxu0 0.0
  %1672 = vmatmul.mubr.f32.gmra.mrb[0].mxu0 %v1602
  %v1673 = vpop.f32.mrb[0].mxu0
  %v1674 = vadd.f32 0.0, %v1673
  %v1675 = vpop.f32.mrb[0].mxu0
  %1676 = vmatprep.mubr.f32.mxu0 0.0
  %1677 = vmatmul.mubr.f32.gmra.mrb[0].mxu0 %v1604
  %v1678 = vpop.f32.mrb[0].mxu0
  %v1679 = vadd.f32 0.0, %v1678
  %v1680 = vpop.f32.mrb[0].mxu0
  %1681 = vdwg.mxu0
  %1682 = vmatprep.subr.mxu0 0.0
  %1683 = vmatpush1.msra.mxu0 %v1565
  %1684 = vmatprep.subr.mxu0 0.0
  %1685 = vmatpush1.msra.mxu0 %v1566
  %1686 = vmatprep.subr.mxu0 0.0
  %1687 = vmatpush1.msra.mxu0 %v1567
  %1688 = vmatprep.subr.mxu0 0.0
  %1689 = vmatpush1.msra.mxu0 %v1568
  %1690 = vmatprep.subr.mxu0 0.0
  %1691 = vmatpush1.msra.mxu0 %v1569
  %1692 = vmatprep.subr.mxu0 0.0
  %1693 = vmatpush1.msra.mxu0 %v1570
  %1694 = vmatprep.subr.mxu0 0.0
  %1695 = vmatpush1.msra.mxu0 %v1571
  %1696 = vmatprep.subr.mxu0 0.0
  %1697 = vmatpush1.msra.mxu0 %v1572
  %1698 = vmatprep.subr.mxu0 0.0
  %1699 = vmatpush1.msra.mxu0 %v1573
  %1700 = vmatprep.subr.mxu0 0.0
  %1701 = vmatpush1.msra.mxu0 %v1574
  %1702 = vmatprep.subr.mxu0 0.0
  %1703 = vmatpush1.msra.mxu0 %v1575
  %1704 = vmatprep.subr.mxu0 0.0
  %1705 = vmatpush1.msra.mxu0 %v1576
  %1706 = vmatprep.subr.mxu0 0.0
  %1707 = vmatpush1.msra.mxu0 %v1577
  %1708 = vmatprep.subr.mxu0 0.0
  %1709 = vmatpush1.msra.mxu0 %v1578
  %1710 = vmatprep.subr.mxu0 0.0
  %1711 = vmatpush1.msra.mxu0 %v1579
  %1712 = vmatprep.subr.mxu0 0.0
  %1713 = vmatpush1.msra.mxu0 %v1580
  %1714 = vmatprep.subr.mxu0 0.0
  %1715 = vmatpush1.msra.mxu0 0.0
  %1716 = vmatprep.subr.mxu0 0.0
  %1717 = vmatpush1.msra.mxu0 0.0
  %1718 = vmatprep.subr.mxu0 0.0
  %1719 = vmatpush1.msra.mxu0 0.0
  %1720 = vmatprep.subr.mxu0 0.0
  %1721 = vmatpush1.msra.mxu0 0.0
  %1722 = vmatprep.subr.mxu0 0.0
  %1723 = vmatpush1.msra.mxu0 0.0
  %1724 = vmatprep.subr.mxu0 0.0
  %1725 = vmatpush1.msra.mxu0 0.0
  %1726 = vmatprep.subr.mxu0 0.0
  %1727 = vmatpush1.msra.mxu0 0.0
  %1728 = vmatprep.subr.mxu0 0.0
  %1729 = vmatpush1.msra.mxu0 0.0
  %1730 = vmatprep.subr.mxu0 0.0
  %1731 = vmatpush1.msra.mxu0 0.0
  %1732 = vmatprep.subr.mxu0 0.0
  %1733 = vmatpush1.msra.mxu0 0.0
  %1734 = vmatprep.subr.mxu0 0.0
  %1735 = vmatpush1.msra.mxu0 0.0
  %1736 = vmatprep.subr.mxu0 0.0
  %1737 = vmatpush1.msra.mxu0 0.0
  %1738 = vmatprep.subr.mxu0 0.0
  %1739 = vmatpush1.msra.mxu0 0.0
  %1740 = vmatprep.subr.mxu0 0.0
  %1741 = vmatpush1.msra.mxu0 0.0
  %1742 = vmatprep.subr.mxu0 0.0
  %1743 = vmatpush1.msra.mxu0 0.0
  %1744 = vmatprep.subr.mxu0 0.0
  %1745 = vmatpush1.msra.mxu0 0.0
  %1746 = vmatprep.mubr.f32.mxu0 0.0
  %1747 = vmatmul.mubr.f32.gmra.mrb[0].mxu0 %v1562
  %v1748 = vpop.f32.mrb[0].mxu0
  %v1749 = vadd.f32 %v1674, %v1748
  %v1750 = vpop.f32.mrb[0].mxu0
  %1751 = vmatprep.mubr.f32.mxu0 0.0
  %1752 = vmatmul.mubr.f32.gmra.mrb[0].mxu0 %v1563
  %v1753 = vpop.f32.mrb[0].mxu0
  %v1754 = vadd.f32 %v1679, %v1753
  %v1755 = vpop.f32.mrb[0].mxu0
  %1756 = vdwg.mxu0
  %v1757 = vld [vmem:[%s1450] sm:$0xff]
  %v1758 = vld [vmem:[%s1450 + $0x8] sm:$0xff]
  %v1759 = vld [vmem:[%s1450 + $0x10] sm:$0xff]
  %v1760 = vld [vmem:[%s1450 + $0x18] sm:$0xff]
  %v1761 = vld [vmem:[%s1450 + $0x20] sm:$0xff]
  %v1762 = vld [vmem:[%s1450 + $0x28] sm:$0xff]
  %v1763 = vld [vmem:[%s1450 + $0x30] sm:$0xff]
  %v1764 = vld [vmem:[%s1450 + $0x38] sm:$0xff]
  %v1765 = vld [vmem:[%s1450 + $0x40] sm:$0xff]
  %v1766 = vld [vmem:[%s1450 + $0x48] sm:$0xff]
  %v1767 = vld [vmem:[%s1450 + $0x50] sm:$0xff]
  %v1768 = vld [vmem:[%s1450 + $0x58] sm:$0xff]
  %v1769 = vld [vmem:[%s1450 + $0x60] sm:$0xff]
  %v1770 = vld [vmem:[%s1450 + $0x68] sm:$0xff]
  %v1771 = vld [vmem:[%s1450 + $0x70] sm:$0xff]
  %v1772 = vld [vmem:[%s1450 + $0x78] sm:$0xff]
  %v1773 = vrot.slane %v1562, 2
  %v1774 = vrot.slane %v1563, 2
  %v1775 = vsel %vm239, %v1773, %v1774
  %v1776 = vrot.slane %v1564, 2
  %v1777 = vsel %vm239, %v1774, %v1776
  %1780 = vmatprep.subr.mxu0 0.0
  %1781 = vmatpush1.msra.mxu0 %v1757
  %1782 = vmatprep.subr.mxu0 0.0
  %1783 = vmatpush1.msra.mxu0 %v1758
  %1784 = vmatprep.subr.mxu0 0.0
  %1785 = vmatpush1.msra.mxu0 %v1759
  %1786 = vmatprep.subr.mxu0 0.0
  %1787 = vmatpush1.msra.mxu0 %v1760
  %1788 = vmatprep.subr.mxu0 0.0
  %1789 = vmatpush1.msra.mxu0 %v1761
  %1790 = vmatprep.subr.mxu0 0.0
  %1791 = vmatpush1.msra.mxu0 %v1762
  %1792 = vmatprep.subr.mxu0 0.0
  %1793 = vmatpush1.msra.mxu0 %v1763
  %1794 = vmatprep.subr.mxu0 0.0
  %1795 = vmatpush1.msra.mxu0 %v1764
  %1796 = vmatprep.subr.mxu0 0.0
  %1797 = vmatpush1.msra.mxu0 %v1765
  %1798 = vmatprep.subr.mxu0 0.0
  %1799 = vmatpush1.msra.mxu0 %v1766
  %1800 = vmatprep.subr.mxu0 0.0
  %1801 = vmatpush1.msra.mxu0 %v1767
  %1802 = vmatprep.subr.mxu0 0.0
  %1803 = vmatpush1.msra.mxu0 %v1768
  %1804 = vmatprep.subr.mxu0 0.0
  %1805 = vmatpush1.msra.mxu0 %v1769
  %1806 = vmatprep.subr.mxu0 0.0
  %1807 = vmatpush1.msra.mxu0 %v1770
  %1808 = vmatprep.subr.mxu0 0.0
  %1809 = vmatpush1.msra.mxu0 %v1771
  %1810 = vmatprep.subr.mxu0 0.0
  %1811 = vmatpush1.msra.mxu0 %v1772
  %1812 = vmatprep.subr.mxu0 0.0
  %1813 = vmatpush1.msra.mxu0 0.0
  %1814 = vmatprep.subr.mxu0 0.0
  %1815 = vmatpush1.msra.mxu0 0.0
  %1816 = vmatprep.subr.mxu0 0.0
  %1817 = vmatpush1.msra.mxu0 0.0
  %1818 = vmatprep.subr.mxu0 0.0
  %1819 = vmatpush1.msra.mxu0 0.0
  %1820 = vmatprep.subr.mxu0 0.0
  %1821 = vmatpush1.msra.mxu0 0.0
  %1822 = vmatprep.subr.mxu0 0.0
  %1823 = vmatpush1.msra.mxu0 0.0
  %1824 = vmatprep.subr.mxu0 0.0
  %1825 = vmatpush1.msra.mxu0 0.0
  %1826 = vmatprep.subr.mxu0 0.0
  %1827 = vmatpush1.msra.mxu0 0.0
  %1828 = vmatprep.subr.mxu0 0.0
  %1829 = vmatpush1.msra.mxu0 0.0
  %1830 = vmatprep.subr.mxu0 0.0
  %1831 = vmatpush1.msra.mxu0 0.0
  %1832 = vmatprep.subr.mxu0 0.0
  %1833 = vmatpush1.msra.mxu0 0.0
  %1834 = vmatprep.subr.mxu0 0.0
  %1835 = vmatpush1.msra.mxu0 0.0
  %1836 = vmatprep.subr.mxu0 0.0
  %1837 = vmatpush1.msra.mxu0 0.0
  %1838 = vmatprep.subr.mxu0 0.0
  %1839 = vmatpush1.msra.mxu0 0.0
  %1840 = vmatprep.subr.mxu0 0.0
  %1841 = vmatpush1.msra.mxu0 0.0
  %1842 = vmatprep.subr.mxu0 0.0
  %1843 = vmatpush1.msra.mxu0 0.0
  %1844 = vmatprep.mubr.f32.mxu0 0.0
  %1845 = vmatmul.mubr.f32.gmra.mrb[0].mxu0 %v1775
  %v1846 = vpop.f32.mrb[0].mxu0
  %v1847 = vadd.f32 0.0, %v1846
  %v1848 = vpop.f32.mrb[0].mxu0
  %1849 = vmatprep.mubr.f32.mxu0 0.0
  %1850 = vmatmul.mubr.f32.gmra.mrb[0].mxu0 %v1777
  %v1851 = vpop.f32.mrb[0].mxu0
  %v1852 = vadd.f32 0.0, %v1851
  %v1853 = vpop.f32.mrb[0].mxu0
  %1854 = vdwg.mxu0
  %v1855 = vadd.f32 %v1749, %v1847
  %v1856 = vadd.f32 %v1754, %v1852
  %v1857 = vld [vmem:[%s7] sm:$0x1]
  %v1859 = vlaneseq
  %v1860 = vshrl.u32 %v1859, 7
  %v1861 = vsub.s32 0, %v1860
  %v1862 = vrot.slane %v1857, %v1861
  %v1864 = vadd.f32 %v1855, %v1862
  %v1865 = vadd.f32 %v1856, %v1862
  %s1866 = scalar_lea.vmem %s8, 16
  %1867 = vst [vmem:[%s1866] sm:$0xff] %v1864
  %1868 = vst [vmem:[%s1866 + $0x8] sm:$0xff] %v1865
  // Predicated region
  $region34: #{concatenation_forward.1} parent=0 // pred_check
    _
  $region35: #{concatenation_forward.1} parent=0 // pred_check_branch
    %1870 = sbr.rel (0) target = $region37
  $region36: #{concatenation_forward.1} parent=0 // pred_region
    _
  $region37: #{concatenation_forward.1} parent=0 // pred_fallthru
    _
  // Predicated region
  $region38: #{concatenation_forward.1} parent=0 // pred_check
    _
  $region39: #{concatenation_forward.1} parent=0 // pred_check_branch
    %1872 = sbr.rel (0) target = $region41
  $region40: #{concatenation_forward.1} parent=0 // pred_region
    _
  $region41: #{concatenation_forward.1} parent=0 // pred_fallthru
    _

</llo_original>
